<compile_context>
chip_gen: v7x
topology: tpu7x:2x2x1
jax: 0.10.0
libtpu: 0.0.40
codegen_flags: <defaults>
</compile_context>

<pallas_src>
from math import sqrt

import jax
import jax.numpy as jnp
from jax.experimental import pallas as pl
from jax.experimental.pallas import tpu as pltpu  # noqa: F401

# ---- problem sizes (small, consistent with the module) ----
B_BATCH = 2
T_SEQ = 32          # sequence length (2 local blocks of 16)
C_IN = 32           # input_size
H_HID = 64          # hidden_size
N_HEADS = 4         # attn_heads
HEAD_DIM = C_IN // N_HEADS
LOCAL_BLOCK = 16    # local_attn_block_size
LN_EPS = 1e-5       # PyTorch LayerNorm default
TT = B_BATCH * T_SEQ

# ---- packed-parameter slab layout: one lane-dense (136, 128) f32 operand ----
ROW_WQKVO = 0       # rows   0: 32, cols 0:128  = [Wq*scale | Wk | Wv | Wo]
ROW_W1 = 32         # rows  32: 64, cols 0: 64  = W1 (C, HID)
ROW_W2 = 64         # rows  64:128, cols 0: 32  = W2 (HID, C)
ROW_LN1G = 128      # single rows for vectors (cols 0:32 / 0:64 / 0:96)
ROW_LN1B = 129
ROW_LN2G = 130
ROW_LN2B = 131
ROW_BQKV = 132      # cols 0:96 = [bq*scale | bk | bv], cols 96:128 = 0
ROW_BO = 133
ROW_B1 = 134
ROW_B2 = 135
N_ROWS = 136        # multiple of 8 sublanes


def _layer_norm(x, gamma, beta):
    mean = jnp.mean(x, axis=-1, keepdims=True)
    var = jnp.mean((x - mean) ** 2, axis=-1, keepdims=True)
    return (x - mean) * jax.lax.rsqrt(var + LN_EPS) * gamma + beta


def _gelu_tanh(x):
    # TODO(synk): PyTorch nn.GELU() default is the exact erf form; the tanh
    # approximation is used (documented) since it has a guaranteed Mosaic
    # lowering; the in-file reference uses the same form.
    c = jnp.float32(0.7978845608028654)  # sqrt(2/pi)
    return 0.5 * x * (1.0 + jnp.tanh(c * (x + 0.044715 * x * x * x)))


def block_kernel(x_ref, w_ref, mask_ref, o_ref):
    x = x_ref[...]                                   # (TT, C)
    mask = mask_ref[...]                             # (TT, TT) additive bias

    # static slices of the packed slab (views; no relayout)
    w_qkvo = w_ref[ROW_WQKVO:ROW_WQKVO + C_IN, :]    # (32, 128)
    wo = w_ref[ROW_WQKVO:ROW_WQKVO + C_IN, 3 * C_IN:4 * C_IN]   # (32, 32)
    w1 = w_ref[ROW_W1:ROW_W1 + C_IN, :H_HID]         # (32, 64)
    w2 = w_ref[ROW_W2:ROW_W2 + H_HID, :C_IN]         # (64, 32)
    ln1_g = w_ref[ROW_LN1G:ROW_LN1G + 1, :C_IN]
    ln1_b = w_ref[ROW_LN1B:ROW_LN1B + 1, :C_IN]
    ln2_g = w_ref[ROW_LN2G:ROW_LN2G + 1, :C_IN]
    ln2_b = w_ref[ROW_LN2B:ROW_LN2B + 1, :C_IN]
    b_qkv = w_ref[ROW_BQKV:ROW_BQKV + 1, :]           # (1, 128), last 32 = 0
    bo = w_ref[ROW_BO:ROW_BO + 1, :C_IN]
    b1 = w_ref[ROW_B1:ROW_B1 + 1, :H_HID]
    b2 = w_ref[ROW_B2:ROW_B2 + 1, :C_IN]

    # ----- norm1 + fused QKV projection (single full-width MXU matmul) -----
    xn = _layer_norm(x, ln1_g, ln1_b)
    qkvo = jnp.dot(xn, w_qkvo, preferred_element_type=jnp.float32) + b_qkv
    # qkvo columns: [0:32)=q*scale, [32:64)=k, [64:96)=v, [96:128) unused

    # ----- sparse multi-head causal self-attention (per-head, static slices) -----
    o_parts = []
    for h in range(N_HEADS):
        lo = h * HEAD_DIM
        qh = qkvo[:, lo:lo + HEAD_DIM]                       # (TT, D), pre-scaled
        kh = qkvo[:, C_IN + lo:C_IN + lo + HEAD_DIM]          # (TT, D)
        vh = qkvo[:, 2 * C_IN + lo:2 * C_IN + lo + HEAD_DIM]  # (TT, D)

        # scores: q @ k^T via dot_general (rhs-transposed MXU matmul)
        s = jax.lax.dot_general(qh, kh, (((1,), (1,)), ((), ())),
                                preferred_element_type=jnp.float32) + mask
        m = jnp.max(s, axis=-1, keepdims=True)
        p = jnp.exp(s - m)
        p = p * pl.reciprocal(jnp.sum(p, axis=-1, keepdims=True), approx=True)
        o_parts.append(jnp.dot(p, vh, preferred_element_type=jnp.float32))

    o_cat = jnp.concatenate(o_parts, axis=-1)                 # (TT, C)
    attn = jnp.dot(o_cat, wo, preferred_element_type=jnp.float32) + bo
    x = x + attn                                              # residual 1

    # ----- norm2 + feed-forward -----
    xn2 = _layer_norm(x, ln2_g, ln2_b)
    hid = jnp.dot(xn2, w1, preferred_element_type=jnp.float32) + b1
    hid = _gelu_tanh(hid)
    ff = jnp.dot(hid, w2, preferred_element_type=jnp.float32) + b2

    o_ref[...] = x + ff                                       # residual 2


# --------------------------- host-side (init-time) ---------------------------

def make_params(key):
    ks = jax.random.split(key, 16)
    s = 0.02
    n = lambda i, shape: s * jax.random.normal(ks[i], shape, jnp.float32)
    return {
        "ln1_g": 1.0 + n(0, (C_IN,)), "ln1_b": n(1, (C_IN,)),
        "wq": n(2, (C_IN, C_IN)), "bq": n(3, (C_IN,)),
        "wk": n(4, (C_IN, C_IN)), "bk": n(5, (C_IN,)),
        "wv": n(6, (C_IN, C_IN)), "bv": n(7, (C_IN,)),
        "wo": n(8, (C_IN, C_IN)), "bo": n(9, (C_IN,)),
        "ln2_g": 1.0 + n(10, (C_IN,)), "ln2_b": n(11, (C_IN,)),
        "w1": n(12, (C_IN, H_HID)), "b1": n(13, (H_HID,)),
        "w2": n(14, (H_HID, C_IN)), "b2": n(15, (C_IN,)),
    }


def pack_params(p):
    """Pack the 16 logical tensors into one lane-dense (136, 128) slab.

    Runs ONCE at init (hoisted out of the per-call hot path).  The
    1/sqrt(head_dim) attention scale is folded into Wq and bq here.
    """
    scale = jnp.float32(1.0 / sqrt(HEAD_DIM))
    w = jnp.zeros((N_ROWS, 128), jnp.float32)
    w = w.at[ROW_WQKVO:ROW_WQKVO + C_IN, 0:C_IN].set(p["wq"] * scale)
    w = w.at[ROW_WQKVO:ROW_WQKVO + C_IN, C_IN:2 * C_IN].set(p["wk"])
    w = w.at[ROW_WQKVO:ROW_WQKVO + C_IN, 2 * C_IN:3 * C_IN].set(p["wv"])
    w = w.at[ROW_WQKVO:ROW_WQKVO + C_IN, 3 * C_IN:4 * C_IN].set(p["wo"])
    w = w.at[ROW_W1:ROW_W1 + C_IN, 0:H_HID].set(p["w1"])
    w = w.at[ROW_W2:ROW_W2 + H_HID, 0:C_IN].set(p["w2"])
    w = w.at[ROW_LN1G, 0:C_IN].set(p["ln1_g"])
    w = w.at[ROW_LN1B, 0:C_IN].set(p["ln1_b"])
    w = w.at[ROW_LN2G, 0:C_IN].set(p["ln2_g"])
    w = w.at[ROW_LN2B, 0:C_IN].set(p["ln2_b"])
    w = w.at[ROW_BQKV, 0:C_IN].set(p["bq"] * scale)
    w = w.at[ROW_BQKV, C_IN:2 * C_IN].set(p["bk"])
    w = w.at[ROW_BQKV, 2 * C_IN:3 * C_IN].set(p["bv"])
    w = w.at[ROW_BO, 0:C_IN].set(p["bo"])
    w = w.at[ROW_B1, 0:H_HID].set(p["b1"])
    w = w.at[ROW_B2, 0:C_IN].set(p["b2"])
    return w


def make_mask_bias():
    """Additive {0, -1e30} bias over the flattened (batch*seq) axis.

    Block-diagonal over batch, causal, and 'fixed' sparse (local 16-block +
    strided summary columns).  Static for fixed B/T/LOCAL_BLOCK, so built
    once at init and passed to the kernel as a (64, 64) operand.
    """
    rows = jax.lax.broadcasted_iota(jnp.int32, (TT, TT), 0)
    cols = jax.lax.broadcasted_iota(jnp.int32, (TT, TT), 1)
    same_batch = (rows // T_SEQ) == (cols // T_SEQ)
    causal = cols <= rows
    local = (rows // LOCAL_BLOCK) == (cols // LOCAL_BLOCK)
    strided = (cols % LOCAL_BLOCK) == (LOCAL_BLOCK - 1)
    keep = same_batch & causal & (local | strided)
    return jnp.where(keep, jnp.float32(0.0), jnp.float32(-1e30))


# ------------------------------- hot path -------------------------------

@jax.jit
def sparse_transformer_block(x, w_slab, mask):
    B, T, C = x.shape
    x2d = x.reshape(B * T, C)                        # contiguous, free reshape
    out2d = pl.pallas_call(
        block_kernel,
        out_shape=jax.ShapeDtypeStruct((B * T, C), jnp.float32),
    )(x2d, w_slab, mask)
    return out2d.reshape(B, T, C)


# ---- pure-JAX reference (per-batch, per-head math) for correctness ----
def reference_block(x, p):
    def ln(v, g, b):
        m = jnp.mean(v, -1, keepdims=True)
        var = jnp.mean((v - m) ** 2, -1, keepdims=True)
        return (v - m) * jax.lax.rsqrt(var + LN_EPS) * g + b

    rows = jax.lax.broadcasted_iota(jnp.int32, (T_SEQ, T_SEQ), 0)
    cols = jax.lax.broadcasted_iota(jnp.int32, (T_SEQ, T_SEQ), 1)
    mask = (cols <= rows) & (((rows // LOCAL_BLOCK) == (cols // LOCAL_BLOCK))
                             | ((cols % LOCAL_BLOCK) == (LOCAL_BLOCK - 1)))

    def one(xb):
        xn = ln(xb, p["ln1_g"], p["ln1_b"])
        q = xn @ p["wq"] + p["bq"]
        k = xn @ p["wk"] + p["bk"]
        v = xn @ p["wv"] + p["bv"]
        outs = []
        for h in range(N_HEADS):
            sl = slice(h * HEAD_DIM, (h + 1) * HEAD_DIM)
            s = (q[:, sl] @ k[:, sl].T) / sqrt(HEAD_DIM)
            s = jnp.where(mask, s, -1e30)
            pm = jax.nn.softmax(s, axis=-1)
            outs.append(pm @ v[:, sl])
        attn = jnp.concatenate(outs, -1) @ p["wo"] + p["bo"]
        xb = xb + attn
        xn2 = ln(xb, p["ln2_g"], p["ln2_b"])
        hid = xn2 @ p["w1"] + p["b1"]
        c = 0.7978845608028654
        hid = 0.5 * hid * (1.0 + jnp.tanh(c * (hid + 0.044715 * hid ** 3)))
        return xb + hid @ p["w2"] + p["b2"]

    return jax.vmap(one)(x)


if __name__ == "__main__":
    key = jax.random.PRNGKey(0)
    kx, kp = jax.random.split(key)
    x = jax.random.normal(kx, (B_BATCH, T_SEQ, C_IN), jnp.float32)
    params = make_params(kp)

    # One-time init: pack params + build static mask (hoisted out of hot path).
    w_slab = jax.block_until_ready(pack_params(params))
    mask = jax.block_until_ready(make_mask_bias())

    out = jax.block_until_ready(sparse_transformer_block(x, w_slab, mask))
    ref = reference_block(x, params)

    assert out.shape == (B_BATCH, T_SEQ, C_IN)
    # Tolerance covers the approx reciprocal in the softmax normalization.
    assert jnp.allclose(out, ref, atol=2e-3, rtol=2e-3), "mismatch vs reference"

    print("KERNEL_OK")
</pallas_src>

<mosaic_0001>
module attributes {stable_mosaic.version = 11 : i64} {
  func.func @block_kernel(%arg0: memref<64x32xf32, #tpu.memory_space<vmem>>, %arg1: memref<136x128xf32, #tpu.memory_space<vmem>>, %arg2: memref<64x64xf32, #tpu.memory_space<vmem>>, %arg3: memref<64x32xf32, #tpu.memory_space<vmem>>) attributes {dimension_semantics = [], scalar_prefetch = 0 : i64, scratch_operands = 0 : i64, tpu.core_type = #tpu.core_type<tc>} {
    %c0 = arith.constant 0 : index
    %c0_0 = arith.constant 0 : index
    %0 = vector.load %arg0[%c0, %c0_0] : memref<64x32xf32, #tpu.memory_space<vmem>>, vector<64x32xf32>
    %c0_1 = arith.constant 0 : index
    %c0_2 = arith.constant 0 : index
    %1 = vector.load %arg2[%c0_1, %c0_2] : memref<64x64xf32, #tpu.memory_space<vmem>>, vector<64x64xf32>
    %c0_3 = arith.constant 0 : index
    %c0_4 = arith.constant 0 : index
    %2 = vector.load %arg1[%c0_3, %c0_4] : memref<136x128xf32, #tpu.memory_space<vmem>>, vector<32x128xf32>
    %c0_5 = arith.constant 0 : index
    %c96 = arith.constant 96 : index
    %3 = vector.load %arg1[%c0_5, %c96] : memref<136x128xf32, #tpu.memory_space<vmem>>, vector<32x32xf32>
    %c32 = arith.constant 32 : index
    %c0_6 = arith.constant 0 : index
    %4 = vector.load %arg1[%c32, %c0_6] : memref<136x128xf32, #tpu.memory_space<vmem>>, vector<32x64xf32>
    %c64 = arith.constant 64 : index
    %c0_7 = arith.constant 0 : index
    %5 = vector.load %arg1[%c64, %c0_7] : memref<136x128xf32, #tpu.memory_space<vmem>>, vector<64x32xf32>
    %c128 = arith.constant 128 : index
    %c0_8 = arith.constant 0 : index
    %6 = vector.load %arg1[%c128, %c0_8] : memref<136x128xf32, #tpu.memory_space<vmem>>, vector<1x32xf32>
    %c129 = arith.constant 129 : index
    %c0_9 = arith.constant 0 : index
    %7 = vector.load %arg1[%c129, %c0_9] : memref<136x128xf32, #tpu.memory_space<vmem>>, vector<1x32xf32>
    %c130 = arith.constant 130 : index
    %c0_10 = arith.constant 0 : index
    %8 = vector.load %arg1[%c130, %c0_10] : memref<136x128xf32, #tpu.memory_space<vmem>>, vector<1x32xf32>
    %c131 = arith.constant 131 : index
    %c0_11 = arith.constant 0 : index
    %9 = vector.load %arg1[%c131, %c0_11] : memref<136x128xf32, #tpu.memory_space<vmem>>, vector<1x32xf32>
    %c132 = arith.constant 132 : index
    %c0_12 = arith.constant 0 : index
    %10 = vector.load %arg1[%c132, %c0_12] : memref<136x128xf32, #tpu.memory_space<vmem>>, vector<1x128xf32>
    %c133 = arith.constant 133 : index
    %c0_13 = arith.constant 0 : index
    %11 = vector.load %arg1[%c133, %c0_13] : memref<136x128xf32, #tpu.memory_space<vmem>>, vector<1x32xf32>
    %c134 = arith.constant 134 : index
    %c0_14 = arith.constant 0 : index
    %12 = vector.load %arg1[%c134, %c0_14] : memref<136x128xf32, #tpu.memory_space<vmem>>, vector<1x64xf32>
    %c135 = arith.constant 135 : index
    %c0_15 = arith.constant 0 : index
    %13 = vector.load %arg1[%c135, %c0_15] : memref<136x128xf32, #tpu.memory_space<vmem>>, vector<1x32xf32>
    %cst = arith.constant dense<0.000000e+00> : vector<64xf32>
    %14 = vector.multi_reduction <add>, %0, %cst [1] : vector<64x32xf32> to vector<64xf32>
    %15 = vector.shape_cast %14 : vector<64xf32> to vector<64x1xf32>
    %cst_16 = arith.constant 3.200000e+01 : f32
    %16 = vector.broadcast %cst_16 : f32 to vector<64x1xf32>
    %17 = arith.divf %15, %16 : vector<64x1xf32>
    %18 = vector.broadcast %17 : vector<64x1xf32> to vector<64x32xf32>
    %19 = arith.subf %0, %18 : vector<64x32xf32>
    %20 = arith.mulf %19, %19 : vector<64x32xf32>
    %cst_17 = arith.constant dense<0.000000e+00> : vector<64xf32>
    %21 = vector.multi_reduction <add>, %20, %cst_17 [1] : vector<64x32xf32> to vector<64xf32>
    %22 = vector.shape_cast %21 : vector<64xf32> to vector<64x1xf32>
    %cst_18 = arith.constant 3.200000e+01 : f32
    %23 = vector.broadcast %cst_18 : f32 to vector<64x1xf32>
    %24 = arith.divf %22, %23 : vector<64x1xf32>
    %25 = vector.broadcast %17 : vector<64x1xf32> to vector<64x32xf32>
    %26 = arith.subf %0, %25 : vector<64x32xf32>
    %cst_19 = arith.constant 9.99999974E-6 : f32
    %27 = vector.broadcast %cst_19 : f32 to vector<64x1xf32>
    %28 = arith.addf %24, %27 : vector<64x1xf32>
    %29 = math.rsqrt %28 : vector<64x1xf32>
    %30 = vector.broadcast %29 : vector<64x1xf32> to vector<64x32xf32>
    %31 = arith.mulf %26, %30 : vector<64x32xf32>
    %32 = vector.broadcast %6 : vector<1x32xf32> to vector<64x32xf32>
    %33 = arith.mulf %31, %32 : vector<64x32xf32>
    %34 = vector.broadcast %7 : vector<1x32xf32> to vector<64x32xf32>
    %35 = arith.addf %33, %34 : vector<64x32xf32>
    %cst_20 = arith.constant dense<0.000000e+00> : vector<64x128xf32>
    %36 = tpu.matmul %35, %2, %cst_20 {dimension_numbers = #tpu.dot_dimension_numbers<[1], [0], [0], [1], [0, 0, 1, 1], [], []>} : vector<64x32xf32>, vector<32x128xf32>, vector<64x128xf32> -> vector<64x128xf32>
    %37 = vector.broadcast %10 : vector<1x128xf32> to vector<64x128xf32>
    %38 = arith.addf %36, %37 : vector<64x128xf32>
    %39 = vector.extract_strided_slice %38 {offsets = [0, 0], sizes = [64, 8], strides = [1, 1]} : vector<64x128xf32> to vector<64x8xf32>
    %40 = vector.extract_strided_slice %38 {offsets = [0, 32], sizes = [64, 8], strides = [1, 1]} : vector<64x128xf32> to vector<64x8xf32>
    %41 = vector.extract_strided_slice %38 {offsets = [0, 64], sizes = [64, 8], strides = [1, 1]} : vector<64x128xf32> to vector<64x8xf32>
    %cst_21 = arith.constant dense<0.000000e+00> : vector<64x64xf32>
    %42 = tpu.matmul %39, %40, %cst_21 {dimension_numbers = #tpu.dot_dimension_numbers<[1], [1], [0], [0], [0, 0, 1, 0], [], []>} : vector<64x8xf32>, vector<64x8xf32>, vector<64x64xf32> -> vector<64x64xf32>
    %43 = arith.addf %42, %1 : vector<64x64xf32>
    %cst_22 = arith.constant dense<0xFF800000> : vector<64xf32>
    %44 = vector.multi_reduction <maximumf>, %43, %cst_22 [1] : vector<64x64xf32> to vector<64xf32>
    %45 = vector.shape_cast %44 : vector<64xf32> to vector<64x1xf32>
    %46 = vector.broadcast %45 : vector<64x1xf32> to vector<64x64xf32>
    %47 = arith.subf %43, %46 : vector<64x64xf32>
    %48 = math.exp %47 : vector<64x64xf32>
    %cst_23 = arith.constant dense<0.000000e+00> : vector<64xf32>
    %49 = vector.multi_reduction <add>, %48, %cst_23 [1] : vector<64x64xf32> to vector<64xf32>
    %50 = vector.shape_cast %49 : vector<64xf32> to vector<64x1xf32>
    %51 = tpu.reciprocal %50 {approx = true} : vector<64x1xf32> -> vector<64x1xf32>
    %52 = vector.broadcast %51 : vector<64x1xf32> to vector<64x64xf32>
    %53 = arith.mulf %48, %52 : vector<64x64xf32>
    %cst_24 = arith.constant dense<0.000000e+00> : vector<64x8xf32>
    %54 = tpu.matmul %53, %41, %cst_24 {dimension_numbers = #tpu.dot_dimension_numbers<[1], [0], [0], [1], [0, 0, 1, 1], [], []>} : vector<64x64xf32>, vector<64x8xf32>, vector<64x8xf32> -> vector<64x8xf32>
    %55 = vector.extract_strided_slice %38 {offsets = [0, 8], sizes = [64, 8], strides = [1, 1]} : vector<64x128xf32> to vector<64x8xf32>
    %56 = vector.extract_strided_slice %38 {offsets = [0, 40], sizes = [64, 8], strides = [1, 1]} : vector<64x128xf32> to vector<64x8xf32>
    %57 = vector.extract_strided_slice %38 {offsets = [0, 72], sizes = [64, 8], strides = [1, 1]} : vector<64x128xf32> to vector<64x8xf32>
    %cst_25 = arith.constant dense<0.000000e+00> : vector<64x64xf32>
    %58 = tpu.matmul %55, %56, %cst_25 {dimension_numbers = #tpu.dot_dimension_numbers<[1], [1], [0], [0], [0, 0, 1, 0], [], []>} : vector<64x8xf32>, vector<64x8xf32>, vector<64x64xf32> -> vector<64x64xf32>
    %59 = arith.addf %58, %1 : vector<64x64xf32>
    %cst_26 = arith.constant dense<0xFF800000> : vector<64xf32>
    %60 = vector.multi_reduction <maximumf>, %59, %cst_26 [1] : vector<64x64xf32> to vector<64xf32>
    %61 = vector.shape_cast %60 : vector<64xf32> to vector<64x1xf32>
    %62 = vector.broadcast %61 : vector<64x1xf32> to vector<64x64xf32>
    %63 = arith.subf %59, %62 : vector<64x64xf32>
    %64 = math.exp %63 : vector<64x64xf32>
    %cst_27 = arith.constant dense<0.000000e+00> : vector<64xf32>
    %65 = vector.multi_reduction <add>, %64, %cst_27 [1] : vector<64x64xf32> to vector<64xf32>
    %66 = vector.shape_cast %65 : vector<64xf32> to vector<64x1xf32>
    %67 = tpu.reciprocal %66 {approx = true} : vector<64x1xf32> -> vector<64x1xf32>
    %68 = vector.broadcast %67 : vector<64x1xf32> to vector<64x64xf32>
    %69 = arith.mulf %64, %68 : vector<64x64xf32>
    %cst_28 = arith.constant dense<0.000000e+00> : vector<64x8xf32>
    %70 = tpu.matmul %69, %57, %cst_28 {dimension_numbers = #tpu.dot_dimension_numbers<[1], [0], [0], [1], [0, 0, 1, 1], [], []>} : vector<64x64xf32>, vector<64x8xf32>, vector<64x8xf32> -> vector<64x8xf32>
    %71 = vector.extract_strided_slice %38 {offsets = [0, 16], sizes = [64, 8], strides = [1, 1]} : vector<64x128xf32> to vector<64x8xf32>
    %72 = vector.extract_strided_slice %38 {offsets = [0, 48], sizes = [64, 8], strides = [1, 1]} : vector<64x128xf32> to vector<64x8xf32>
    %73 = vector.extract_strided_slice %38 {offsets = [0, 80], sizes = [64, 8], strides = [1, 1]} : vector<64x128xf32> to vector<64x8xf32>
    %cst_29 = arith.constant dense<0.000000e+00> : vector<64x64xf32>
    %74 = tpu.matmul %71, %72, %cst_29 {dimension_numbers = #tpu.dot_dimension_numbers<[1], [1], [0], [0], [0, 0, 1, 0], [], []>} : vector<64x8xf32>, vector<64x8xf32>, vector<64x64xf32> -> vector<64x64xf32>
    %75 = arith.addf %74, %1 : vector<64x64xf32>
    %cst_30 = arith.constant dense<0xFF800000> : vector<64xf32>
    %76 = vector.multi_reduction <maximumf>, %75, %cst_30 [1] : vector<64x64xf32> to vector<64xf32>
    %77 = vector.shape_cast %76 : vector<64xf32> to vector<64x1xf32>
    %78 = vector.broadcast %77 : vector<64x1xf32> to vector<64x64xf32>
    %79 = arith.subf %75, %78 : vector<64x64xf32>
    %80 = math.exp %79 : vector<64x64xf32>
    %cst_31 = arith.constant dense<0.000000e+00> : vector<64xf32>
    %81 = vector.multi_reduction <add>, %80, %cst_31 [1] : vector<64x64xf32> to vector<64xf32>
    %82 = vector.shape_cast %81 : vector<64xf32> to vector<64x1xf32>
    %83 = tpu.reciprocal %82 {approx = true} : vector<64x1xf32> -> vector<64x1xf32>
    %84 = vector.broadcast %83 : vector<64x1xf32> to vector<64x64xf32>
    %85 = arith.mulf %80, %84 : vector<64x64xf32>
    %cst_32 = arith.constant dense<0.000000e+00> : vector<64x8xf32>
    %86 = tpu.matmul %85, %73, %cst_32 {dimension_numbers = #tpu.dot_dimension_numbers<[1], [0], [0], [1], [0, 0, 1, 1], [], []>} : vector<64x64xf32>, vector<64x8xf32>, vector<64x8xf32> -> vector<64x8xf32>
    %87 = vector.extract_strided_slice %38 {offsets = [0, 24], sizes = [64, 8], strides = [1, 1]} : vector<64x128xf32> to vector<64x8xf32>
    %88 = vector.extract_strided_slice %38 {offsets = [0, 56], sizes = [64, 8], strides = [1, 1]} : vector<64x128xf32> to vector<64x8xf32>
    %89 = vector.extract_strided_slice %38 {offsets = [0, 88], sizes = [64, 8], strides = [1, 1]} : vector<64x128xf32> to vector<64x8xf32>
    %cst_33 = arith.constant dense<0.000000e+00> : vector<64x64xf32>
    %90 = tpu.matmul %87, %88, %cst_33 {dimension_numbers = #tpu.dot_dimension_numbers<[1], [1], [0], [0], [0, 0, 1, 0], [], []>} : vector<64x8xf32>, vector<64x8xf32>, vector<64x64xf32> -> vector<64x64xf32>
    %91 = arith.addf %90, %1 : vector<64x64xf32>
    %cst_34 = arith.constant dense<0xFF800000> : vector<64xf32>
    %92 = vector.multi_reduction <maximumf>, %91, %cst_34 [1] : vector<64x64xf32> to vector<64xf32>
    %93 = vector.shape_cast %92 : vector<64xf32> to vector<64x1xf32>
    %94 = vector.broadcast %93 : vector<64x1xf32> to vector<64x64xf32>
    %95 = arith.subf %91, %94 : vector<64x64xf32>
    %96 = math.exp %95 : vector<64x64xf32>
    %cst_35 = arith.constant dense<0.000000e+00> : vector<64xf32>
    %97 = vector.multi_reduction <add>, %96, %cst_35 [1] : vector<64x64xf32> to vector<64xf32>
    %98 = vector.shape_cast %97 : vector<64xf32> to vector<64x1xf32>
    %99 = tpu.reciprocal %98 {approx = true} : vector<64x1xf32> -> vector<64x1xf32>
    %100 = vector.broadcast %99 : vector<64x1xf32> to vector<64x64xf32>
    %101 = arith.mulf %96, %100 : vector<64x64xf32>
    %cst_36 = arith.constant dense<0.000000e+00> : vector<64x8xf32>
    %102 = tpu.matmul %101, %89, %cst_36 {dimension_numbers = #tpu.dot_dimension_numbers<[1], [0], [0], [1], [0, 0, 1, 1], [], []>} : vector<64x64xf32>, vector<64x8xf32>, vector<64x8xf32> -> vector<64x8xf32>
    %103 = tpu.concatenate %54, %70, %86, %102 in 1 : vector<64x8xf32>, vector<64x8xf32>, vector<64x8xf32>, vector<64x8xf32> -> vector<64x32xf32>
    %cst_37 = arith.constant dense<0.000000e+00> : vector<64x32xf32>
    %104 = tpu.matmul %103, %3, %cst_37 {dimension_numbers = #tpu.dot_dimension_numbers<[1], [0], [0], [1], [0, 0, 1, 1], [], []>} : vector<64x32xf32>, vector<32x32xf32>, vector<64x32xf32> -> vector<64x32xf32>
    %105 = vector.broadcast %11 : vector<1x32xf32> to vector<64x32xf32>
    %106 = arith.addf %104, %105 : vector<64x32xf32>
    %107 = arith.addf %0, %106 : vector<64x32xf32>
    %cst_38 = arith.constant dense<0.000000e+00> : vector<64xf32>
    %108 = vector.multi_reduction <add>, %107, %cst_38 [1] : vector<64x32xf32> to vector<64xf32>
    %109 = vector.shape_cast %108 : vector<64xf32> to vector<64x1xf32>
    %cst_39 = arith.constant 3.200000e+01 : f32
    %110 = vector.broadcast %cst_39 : f32 to vector<64x1xf32>
    %111 = arith.divf %109, %110 : vector<64x1xf32>
    %112 = vector.broadcast %111 : vector<64x1xf32> to vector<64x32xf32>
    %113 = arith.subf %107, %112 : vector<64x32xf32>
    %114 = arith.mulf %113, %113 : vector<64x32xf32>
    %cst_40 = arith.constant dense<0.000000e+00> : vector<64xf32>
    %115 = vector.multi_reduction <add>, %114, %cst_40 [1] : vector<64x32xf32> to vector<64xf32>
    %116 = vector.shape_cast %115 : vector<64xf32> to vector<64x1xf32>
    %cst_41 = arith.constant 3.200000e+01 : f32
    %117 = vector.broadcast %cst_41 : f32 to vector<64x1xf32>
    %118 = arith.divf %116, %117 : vector<64x1xf32>
    %119 = vector.broadcast %111 : vector<64x1xf32> to vector<64x32xf32>
    %120 = arith.subf %107, %119 : vector<64x32xf32>
    %cst_42 = arith.constant 9.99999974E-6 : f32
    %121 = vector.broadcast %cst_42 : f32 to vector<64x1xf32>
    %122 = arith.addf %118, %121 : vector<64x1xf32>
    %123 = math.rsqrt %122 : vector<64x1xf32>
    %124 = vector.broadcast %123 : vector<64x1xf32> to vector<64x32xf32>
    %125 = arith.mulf %120, %124 : vector<64x32xf32>
    %126 = vector.broadcast %8 : vector<1x32xf32> to vector<64x32xf32>
    %127 = arith.mulf %125, %126 : vector<64x32xf32>
    %128 = vector.broadcast %9 : vector<1x32xf32> to vector<64x32xf32>
    %129 = arith.addf %127, %128 : vector<64x32xf32>
    %cst_43 = arith.constant dense<0.000000e+00> : vector<64x64xf32>
    %130 = tpu.matmul %129, %4, %cst_43 {dimension_numbers = #tpu.dot_dimension_numbers<[1], [0], [0], [1], [0, 0, 1, 1], [], []>} : vector<64x32xf32>, vector<32x64xf32>, vector<64x64xf32> -> vector<64x64xf32>
    %131 = vector.broadcast %12 : vector<1x64xf32> to vector<64x64xf32>
    %132 = arith.addf %130, %131 : vector<64x64xf32>
    %cst_44 = arith.constant 5.000000e-01 : f32
    %133 = vector.broadcast %cst_44 : f32 to vector<64x64xf32>
    %134 = arith.mulf %133, %132 : vector<64x64xf32>
    %cst_45 = arith.constant 4.471500e-02 : f32
    %135 = vector.broadcast %cst_45 : f32 to vector<64x64xf32>
    %136 = arith.mulf %135, %132 : vector<64x64xf32>
    %137 = arith.mulf %136, %132 : vector<64x64xf32>
    %138 = arith.mulf %137, %132 : vector<64x64xf32>
    %139 = arith.addf %132, %138 : vector<64x64xf32>
    %cst_46 = arith.constant 0.797884583 : f32
    %140 = vector.broadcast %cst_46 : f32 to vector<64x64xf32>
    %141 = arith.mulf %140, %139 : vector<64x64xf32>
    %142 = math.tanh %141 : vector<64x64xf32>
    %cst_47 = arith.constant 1.000000e+00 : f32
    %143 = vector.broadcast %cst_47 : f32 to vector<64x64xf32>
    %144 = arith.addf %143, %142 : vector<64x64xf32>
    %145 = arith.mulf %134, %144 : vector<64x64xf32>
    %cst_48 = arith.constant dense<0.000000e+00> : vector<64x32xf32>
    %146 = tpu.matmul %145, %5, %cst_48 {dimension_numbers = #tpu.dot_dimension_numbers<[1], [0], [0], [1], [0, 0, 1, 1], [], []>} : vector<64x64xf32>, vector<64x32xf32>, vector<64x32xf32> -> vector<64x32xf32>
    %147 = vector.broadcast %13 : vector<1x32xf32> to vector<64x32xf32>
    %148 = arith.addf %146, %147 : vector<64x32xf32>
    %149 = arith.addf %107, %148 : vector<64x32xf32>
    %c0_49 = arith.constant 0 : index
    %c0_50 = arith.constant 0 : index
    %150 = vector.load %arg3[%c0_49, %c0_50] : memref<64x32xf32, #tpu.memory_space<vmem>>, vector<64x32xf32>
    tpu.vector_store %arg3[%c0_49, %c0_50], %149 {strides = array<i32>} : memref<64x32xf32, #tpu.memory_space<vmem>>, vector<64x32xf32>,
    return
  }
}

</mosaic_0001>

<llo_original>
// kernel: sparse_transformer_block.1
$region0: #{sparse_transformer_block.1}
  #allocation0 [shape = 'u32[]', space=smem, size = 0x4, offset = 0x4, fixed_abs, tag = 'smem constant byte address 0x4 - core index']
  #allocation1 [shape = 'u32[144,128]{1,0:T(1,128)}', space=vmem, size = 0x12000, scoped, tag = 'internal scratch']
  %s0 = inlined_call_operand.hbm [shape: f32[64,32], index: 0, kind: input, shape index: {}]
  %s1 = inlined_call_operand.hbm [shape: f32[136,128], index: 1, kind: input, shape index: {}]
  %s2 = inlined_call_operand.hbm [shape: f32[64,64], index: 2, kind: input, shape index: {}]
  %s3 = inlined_call_operand.hbm [shape: f32[64,32], index: 3, kind: output, shape index: {}]
  %s4 = sld [smem:[#allocation0]]
  $region34: #{sparse_transformer_block.1} parent=0
    _
  %s6 = ssub.s32 1, %s4
  %s7 = scalar_select 0, %s6, %s4
  $region1: #{sparse_transformer_block.1} parent=0
    #allocation2 [shape = 'u8[32768]{0}', space=vmem, size = 0x8000, scoped, tag = 'input window, operand 0, single buffered']
    #allocation3 [shape = 's32[1]{0}', space=sflag, size = 0x4, scoped, tag = 'scoped memory for sparse_transformer_block.1']
    #allocation4 [shape = 's32[1]{0}', space=sflag, size = 0x4, scoped, tag = 'scoped memory for sparse_transformer_block.1']
    #allocation5 [shape = 'u8[69632]{0}', space=vmem, size = 0x11000, scoped, tag = 'input window, operand 1, single buffered']
    #allocation6 [shape = 's32[1]{0}', space=sflag, size = 0x4, scoped, tag = 'scoped memory for sparse_transformer_block.1']
    #allocation7 [shape = 'u8[32768]{0}', space=vmem, size = 0x8000, scoped, tag = 'input window, operand 2, single buffered']
    #allocation8 [shape = 'u8[32768]{0}', space=vmem, size = 0x8000, scoped, tag = 'output window, operand 0, single buffered']
    %8 = vsyncpa [#allocation3], 0
    %9 = vsyncpa [#allocation6], 0
    %10 = vsyncpa [#allocation4], 0
    // Predicated region
    $region2: #{sparse_transformer_block.1} parent=1 // pred_check
      _
    $region3: #{sparse_transformer_block.1} parent=1 // pred_check_branch
      %12 = sbr.rel (0) target = $region5
    $region4: #{sparse_transformer_block.1} parent=1 // pred_region
      %s14 = ssub.s32 1024, 1024
      %15 = vsyncadd [#allocation3], %s14
      %s16 = sshll.u32 [#allocation2], 4
      %s17 = int_to_ptr.vmem [resolvable:$true] %s16
      %22 = dma.hbm_to_vmem [thread:$0]  %s0, 1024, %s17, [#allocation3], 128, 128, 8
    $region5: #{sparse_transformer_block.1} parent=1 // pred_fallthru
      _
    // Predicated region
    $region6: #{sparse_transformer_block.1} parent=1 // pred_check
      _
    $region7: #{sparse_transformer_block.1} parent=1 // pred_check_branch
      %24 = sbr.rel (0) target = $region9
    $region8: #{sparse_transformer_block.1} parent=1 // pred_region
      %s26 = ssub.s32 2176, 2176
      %27 = vsyncadd [#allocation6], %s26
      %s28 = sshll.u32 [#allocation5], 4
      %s29 = int_to_ptr.vmem [resolvable:$true] %s28
      %34 = dma.hbm_to_vmem [thread:$0]  %s1, 2176, %s29, [#allocation6], 128, 128, 8
    $region9: #{sparse_transformer_block.1} parent=1 // pred_fallthru
      _
    // Predicated region
    $region10: #{sparse_transformer_block.1} parent=1 // pred_check
      _
    $region11: #{sparse_transformer_block.1} parent=1 // pred_check_branch
      %36 = sbr.rel (0) target = $region13
    $region12: #{sparse_transformer_block.1} parent=1 // pred_region
      %s38 = ssub.s32 1024, 1024
      %39 = vsyncadd [#allocation6], %s38
      %s40 = sshll.u32 [#allocation7], 4
      %s41 = int_to_ptr.vmem [resolvable:$true] %s40
      %46 = dma.hbm_to_vmem [thread:$0]  %s2, 1024, %s41, [#allocation6], 128, 128, 8
    $region13: #{sparse_transformer_block.1} parent=1 // pred_fallthru
      _
    // Predicated region
    $region14: #{sparse_transformer_block.1} parent=1 // pred_check
      _
    $region15: #{sparse_transformer_block.1} parent=1 // pred_check_branch
      %48 = sbr.rel (0) target = $region17
    $region16: #{sparse_transformer_block.1} parent=1 // pred_region
      %49 = dma.done [#allocation3], 1024
    $region17: #{sparse_transformer_block.1} parent=1 // pred_fallthru
      _
    // Predicated region
    $region18: #{sparse_transformer_block.1} parent=1 // pred_check
      _
    $region19: #{sparse_transformer_block.1} parent=1 // pred_check_branch
      %51 = sbr.rel (0) target = $region21
    $region20: #{sparse_transformer_block.1} parent=1 // pred_region
      %52 = dma.done [#allocation6], 2176
    $region21: #{sparse_transformer_block.1} parent=1 // pred_fallthru
      _
    // Predicated region
    $region22: #{sparse_transformer_block.1} parent=1 // pred_check
      _
    $region23: #{sparse_transformer_block.1} parent=1 // pred_check_branch
      %54 = sbr.rel (0) target = $region25
    $region24: #{sparse_transformer_block.1} parent=1 // pred_region
      %55 = dma.done [#allocation6], 1024
    $region25: #{sparse_transformer_block.1} parent=1 // pred_fallthru
      _
    %v56 = vld [vmem:[#allocation2] sm:$0xff]
    %v57 = vld [vmem:[#allocation2 + $0x8] sm:$0xff]
    %v58 = vld [vmem:[#allocation2 + $0x10] sm:$0xff]
    %v59 = vld [vmem:[#allocation2 + $0x18] sm:$0xff]
    %v60 = vld [vmem:[#allocation2 + $0x20] sm:$0xff]
    %v61 = vld [vmem:[#allocation2 + $0x28] sm:$0xff]
    %v62 = vld [vmem:[#allocation2 + $0x30] sm:$0xff]
    %v63 = vld [vmem:[#allocation2 + $0x38] sm:$0xff]
    %v64 = vld [vmem:[#allocation7] sm:$0xff]
    %v65 = vld [vmem:[#allocation7 + $0x8] sm:$0xff]
    %v66 = vld [vmem:[#allocation7 + $0x10] sm:$0xff]
    %v67 = vld [vmem:[#allocation7 + $0x18] sm:$0xff]
    %v68 = vld [vmem:[#allocation7 + $0x20] sm:$0xff]
    %v69 = vld [vmem:[#allocation7 + $0x28] sm:$0xff]
    %v70 = vld [vmem:[#allocation7 + $0x30] sm:$0xff]
    %v71 = vld [vmem:[#allocation7 + $0x38] sm:$0xff]
    %v72 = vld [vmem:[#allocation5] sm:$0xff]
    %v73 = vld [vmem:[#allocation5 + $0x8] sm:$0xff]
    %v74 = vld [vmem:[#allocation5 + $0x10] sm:$0xff]
    %v75 = vld [vmem:[#allocation5 + $0x18] sm:$0xff]
    %v76 = vld [vmem:[#allocation5 + $0x20] sm:$0xff]
    %v77 = vld [vmem:[#allocation5 + $0x28] sm:$0xff]
    %v78 = vld [vmem:[#allocation5 + $0x30] sm:$0xff]
    %v79 = vld [vmem:[#allocation5 + $0x38] sm:$0xff]
    %v80 = vld [vmem:[#allocation5 + $0x40] sm:$0xff]
    %v81 = vld [vmem:[#allocation5 + $0x48] sm:$0xff]
    %v82 = vld [vmem:[#allocation5 + $0x50] sm:$0xff]
    %v83 = vld [vmem:[#allocation5 + $0x58] sm:$0xff]
    %v84 = vld [vmem:[#allocation5 + $0x60] sm:$0xff]
    %v85 = vld [vmem:[#allocation5 + $0x68] sm:$0xff]
    %v86 = vld [vmem:[#allocation5 + $0x70] sm:$0xff]
    %v87 = vld [vmem:[#allocation5 + $0x78] sm:$0xff]
    %v88 = vld [vmem:[#allocation5 + $0x80] sm:$0x1]
    %v89 = vld [vmem:[#allocation5 + $0x81] sm:$0x1]
    %v90 = vld [vmem:[#allocation5 + $0x82] sm:$0x1]
    %v91 = vld [vmem:[#allocation5 + $0x83] sm:$0x1]
    %v92 = vld [vmem:[#allocation5 + $0x84] sm:$0x1]
    %v93 = vld [vmem:[#allocation5 + $0x85] sm:$0x1]
    %v94 = vld [vmem:[#allocation5 + $0x86] sm:$0x1]
    %v95 = vld [vmem:[#allocation5 + $0x87] sm:$0x1]
    %vm96 = vcmask 261120
    %v97 = vsel %vm96, %v56, 0.0
    %98 = vadd.xlane.f32.xlu0 %v97
    %v99 = vpop.xlane.xlu0 %98
    %v100 = vsel %vm96, %v57, 0.0
    %101 = vadd.xlane.f32.xlu0 %v100
    %v102 = vpop.xlane.xlu0 %101
    %v103 = vsel %vm96, %v58, 0.0
    %104 = vadd.xlane.f32.xlu0 %v103
    %v105 = vpop.xlane.xlu0 %104
    %v106 = vsel %vm96, %v59, 0.0
    %107 = vadd.xlane.f32.xlu0 %v106
    %v108 = vpop.xlane.xlu0 %107
    %v109 = vsel %vm96, %v60, 0.0
    %110 = vadd.xlane.f32.xlu0 %v109
    %v111 = vpop.xlane.xlu0 %110
    %v112 = vsel %vm96, %v61, 0.0
    %113 = vadd.xlane.f32.xlu0 %v112
    %v114 = vpop.xlane.xlu0 %113
    %v115 = vsel %vm96, %v62, 0.0
    %116 = vadd.xlane.f32.xlu0 %v115
    %v117 = vpop.xlane.xlu0 %116
    %v118 = vsel %vm96, %v63, 0.0
    %119 = vadd.xlane.f32.xlu0 %v118
    %v120 = vpop.xlane.xlu0 %119
    %v121 = vrcp.pop 32.0
    %v122 = vmul.f32 %v99, %v121
    %v123 = vmul.f32 %v102, %v121
    %v124 = vmul.f32 %v105, %v121
    %v125 = vmul.f32 %v108, %v121
    %v126 = vmul.f32 %v111, %v121
    %v127 = vmul.f32 %v114, %v121
    %v128 = vmul.f32 %v117, %v121
    %v129 = vmul.f32 %v120, %v121
    %v130 = vsub.f32 %v56, %v122
    %v131 = vsub.f32 %v57, %v123
    %v132 = vsub.f32 %v58, %v124
    %v133 = vsub.f32 %v59, %v125
    %v134 = vsub.f32 %v60, %v126
    %v135 = vsub.f32 %v61, %v127
    %v136 = vsub.f32 %v62, %v128
    %v137 = vsub.f32 %v63, %v129
    %v138 = vmul.f32 %v130, %v130
    %v139 = vmul.f32 %v131, %v131
    %v140 = vmul.f32 %v132, %v132
    %v141 = vmul.f32 %v133, %v133
    %v142 = vmul.f32 %v134, %v134
    %v143 = vmul.f32 %v135, %v135
    %v144 = vmul.f32 %v136, %v136
    %v145 = vmul.f32 %v137, %v137
    %v146 = vsel %vm96, %v138, 0.0
    %147 = vadd.xlane.f32.xlu0 %v146
    %v148 = vpop.xlane.xlu0 %147
    %v149 = vsel %vm96, %v139, 0.0
    %150 = vadd.xlane.f32.xlu0 %v149
    %v151 = vpop.xlane.xlu0 %150
    %v152 = vsel %vm96, %v140, 0.0
    %153 = vadd.xlane.f32.xlu0 %v152
    %v154 = vpop.xlane.xlu0 %153
    %v155 = vsel %vm96, %v141, 0.0
    %156 = vadd.xlane.f32.xlu0 %v155
    %v157 = vpop.xlane.xlu0 %156
    %v158 = vsel %vm96, %v142, 0.0
    %159 = vadd.xlane.f32.xlu0 %v158
    %v160 = vpop.xlane.xlu0 %159
    %v161 = vsel %vm96, %v143, 0.0
    %162 = vadd.xlane.f32.xlu0 %v161
    %v163 = vpop.xlane.xlu0 %162
    %v164 = vsel %vm96, %v144, 0.0
    %165 = vadd.xlane.f32.xlu0 %v164
    %v166 = vpop.xlane.xlu0 %165
    %v167 = vsel %vm96, %v145, 0.0
    %168 = vadd.xlane.f32.xlu0 %v167
    %v169 = vpop.xlane.xlu0 %168
    %v170 = vmul.f32 %v148, %v121
    %v171 = vmul.f32 %v151, %v121
    %v172 = vmul.f32 %v154, %v121
    %v173 = vmul.f32 %v157, %v121
    %v174 = vmul.f32 %v160, %v121
    %v175 = vmul.f32 %v163, %v121
    %v176 = vmul.f32 %v166, %v121
    %v177 = vmul.f32 %v169, %v121
    %v178 = vadd.f32 %v170, 1e-05
    %v179 = vadd.f32 %v171, 1e-05
    %v180 = vadd.f32 %v172, 1e-05
    %v181 = vadd.f32 %v173, 1e-05
    %v182 = vadd.f32 %v174, 1e-05
    %v183 = vadd.f32 %v175, 1e-05
    %v184 = vadd.f32 %v176, 1e-05
    %v185 = vadd.f32 %v177, 1e-05
    %v186 = vrsqrt.pop %v178
    %v187 = vrsqrt.pop %v179
    %v188 = vrsqrt.pop %v180
    %v189 = vrsqrt.pop %v181
    %v190 = vrsqrt.pop %v182
    %v191 = vrsqrt.pop %v183
    %v192 = vrsqrt.pop %v184
    %v193 = vrsqrt.pop %v185
    %v194 = vmul.f32 %v130, %v186
    %v195 = vmul.f32 %v131, %v187
    %v196 = vmul.f32 %v132, %v188
    %v197 = vmul.f32 %v133, %v189
    %v198 = vmul.f32 %v134, %v190
    %v199 = vmul.f32 %v135, %v191
    %v200 = vmul.f32 %v136, %v192
    %v201 = vmul.f32 %v137, %v193
    %v202 = vlaneseq
    %v203 = vshrl.u32 %v202, 7
    %v204 = vsub.s32 0, %v203
    %v205 = vrot.slane %v88, %v204
    %v206 = vmul.f32 %v194, %v205
    %v207 = vmul.f32 %v195, %v205
    %v208 = vmul.f32 %v196, %v205
    %v209 = vmul.f32 %v197, %v205
    %v210 = vmul.f32 %v198, %v205
    %v211 = vmul.f32 %v199, %v205
    %v212 = vmul.f32 %v200, %v205
    %v213 = vmul.f32 %v201, %v205
    %v214 = vlaneseq
    %v215 = vshrl.u32 %v214, 7
    %v216 = vsub.s32 0, %v215
    %v217 = vrot.slane %v89, %v216
    %v218 = vadd.f32 %v206, %v217
    %v219 = vadd.f32 %v207, %v217
    %v220 = vadd.f32 %v208, %v217
    %v221 = vadd.f32 %v209, %v217
    %v222 = vadd.f32 %v210, %v217
    %v223 = vadd.f32 %v211, %v217
    %v224 = vadd.f32 %v212, %v217
    %v225 = vadd.f32 %v213, %v217
    %v226 = vlaneseq
    %v227 = vshrl.u32 %v226, 7
    %v228 = vsub.s32 0, %v227
    %v229 = vrot.slane %v92, %v228
    %v231 = vsel %vm96, %v218, 0
    %v234 = vsel %vm96, %v219, 0
    %v237 = vsel %vm96, %v220, 0
    %v240 = vsel %vm96, %v221, 0
    %v243 = vsel %vm96, %v222, 0
    %v246 = vsel %vm96, %v223, 0
    %v249 = vsel %vm96, %v224, 0
    %v252 = vsel %vm96, %v225, 0
    %254 = vmatprep.subr.mxu0 0.0
    %255 = vmatpush1.msra.mxu0 %v72
    %256 = vmatprep.subr.mxu0 0.0
    %257 = vmatpush1.msra.mxu0 %v73
    %258 = vmatprep.subr.mxu0 0.0
    %259 = vmatpush1.msra.mxu0 %v74
    %260 = vmatprep.subr.mxu0 0.0
    %261 = vmatpush1.msra.mxu0 %v75
    %262 = vmatprep.subr.mxu0 0.0
    %263 = vmatpush1.msra.mxu0 0.0
    %264 = vmatprep.subr.mxu0 0.0
    %265 = vmatpush1.msra.mxu0 0.0
    %266 = vmatprep.subr.mxu0 0.0
    %267 = vmatpush1.msra.mxu0 0.0
    %268 = vmatprep.subr.mxu0 0.0
    %269 = vmatpush1.msra.mxu0 0.0
    %270 = vmatprep.subr.mxu0 0.0
    %271 = vmatpush1.msra.mxu0 0.0
    %272 = vmatprep.subr.mxu0 0.0
    %273 = vmatpush1.msra.mxu0 0.0
    %274 = vmatprep.subr.mxu0 0.0
    %275 = vmatpush1.msra.mxu0 0.0
    %276 = vmatprep.subr.mxu0 0.0
    %277 = vmatpush1.msra.mxu0 0.0
    %278 = vmatprep.subr.mxu0 0.0
    %279 = vmatpush1.msra.mxu0 0.0
    %280 = vmatprep.subr.mxu0 0.0
    %281 = vmatpush1.msra.mxu0 0.0
    %282 = vmatprep.subr.mxu0 0.0
    %283 = vmatpush1.msra.mxu0 0.0
    %284 = vmatprep.subr.mxu0 0.0
    %285 = vmatpush1.msra.mxu0 0.0
    %286 = vmatprep.subr.mxu0 0.0
    %287 = vmatpush1.msra.mxu0 0.0
    %288 = vmatprep.subr.mxu0 0.0
    %289 = vmatpush1.msra.mxu0 0.0
    %290 = vmatprep.subr.mxu0 0.0
    %291 = vmatpush1.msra.mxu0 0.0
    %292 = vmatprep.subr.mxu0 0.0
    %293 = vmatpush1.msra.mxu0 0.0
    %294 = vmatprep.subr.mxu0 0.0
    %295 = vmatpush1.msra.mxu0 0.0
    %296 = vmatprep.subr.mxu0 0.0
    %297 = vmatpush1.msra.mxu0 0.0
    %298 = vmatprep.subr.mxu0 0.0
    %299 = vmatpush1.msra.mxu0 0.0
    %300 = vmatprep.subr.mxu0 0.0
    %301 = vmatpush1.msra.mxu0 0.0
    %302 = vmatprep.subr.mxu0 0.0
    %303 = vmatpush1.msra.mxu0 0.0
    %304 = vmatprep.subr.mxu0 0.0
    %305 = vmatpush1.msra.mxu0 0.0
    %306 = vmatprep.subr.mxu0 0.0
    %307 = vmatpush1.msra.mxu0 0.0
    %308 = vmatprep.subr.mxu0 0.0
    %309 = vmatpush1.msra.mxu0 0.0
    %310 = vmatprep.subr.mxu0 0.0
    %311 = vmatpush1.msra.mxu0 0.0
    %312 = vmatprep.subr.mxu0 0.0
    %313 = vmatpush1.msra.mxu0 0.0
    %314 = vmatprep.subr.mxu0 0.0
    %315 = vmatpush1.msra.mxu0 0.0
    %316 = vmatprep.subr.mxu0 0.0
    %317 = vmatpush1.msra.mxu0 0.0
    %318 = vmatprep.mubr.f32.mxu0 0.0
    %319 = vmatmul.mubr.f32.gmra.mrb[0].mxu0 %v231
    %v320 = vpop.f32.mrb[0].mxu0
    %v321 = vadd.f32 %v229, %v320
    %v322 = vpop.f32.mrb[0].mxu0
    %323 = vmatprep.mubr.f32.mxu0 0.0
    %324 = vmatmul.mubr.f32.gmra.mrb[0].mxu0 %v234
    %v325 = vpop.f32.mrb[0].mxu0
    %v326 = vadd.f32 %v229, %v325
    %v327 = vpop.f32.mrb[0].mxu0
    %328 = vmatprep.mubr.f32.mxu0 0.0
    %329 = vmatmul.mubr.f32.gmra.mrb[0].mxu0 %v237
    %v330 = vpop.f32.mrb[0].mxu0
    %v331 = vadd.f32 %v229, %v330
    %v332 = vpop.f32.mrb[0].mxu0
    %333 = vmatprep.mubr.f32.mxu0 0.0
    %334 = vmatmul.mubr.f32.gmra.mrb[0].mxu0 %v240
    %v335 = vpop.f32.mrb[0].mxu0
    %v336 = vadd.f32 %v229, %v335
    %v337 = vpop.f32.mrb[0].mxu0
    %338 = vmatprep.mubr.f32.mxu0 0.0
    %339 = vmatmul.mubr.f32.gmra.mrb[0].mxu0 %v243
    %v340 = vpop.f32.mrb[0].mxu0
    %v341 = vadd.f32 %v229, %v340
    %v342 = vpop.f32.mrb[0].mxu0
    %343 = vmatprep.mubr.f32.mxu0 0.0
    %344 = vmatmul.mubr.f32.gmra.mrb[0].mxu0 %v246
    %v345 = vpop.f32.mrb[0].mxu0
    %v346 = vadd.f32 %v229, %v345
    %v347 = vpop.f32.mrb[0].mxu0
    %348 = vmatprep.mubr.f32.mxu0 0.0
    %349 = vmatmul.mubr.f32.gmra.mrb[0].mxu0 %v249
    %v350 = vpop.f32.mrb[0].mxu0
    %v351 = vadd.f32 %v229, %v350
    %v352 = vpop.f32.mrb[0].mxu0
    %353 = vmatprep.mubr.f32.mxu0 0.0
    %354 = vmatmul.mubr.f32.gmra.mrb[0].mxu0 %v252
    %v355 = vpop.f32.mrb[0].mxu0
    %v356 = vadd.f32 %v229, %v355
    %v357 = vpop.f32.mrb[0].mxu0
    %358 = vdwg.mxu0
    %367 = vrot.lane.b32.xlu0 %v321, 96
    %v368 = vpop.permute.xlu0 %367
    %369 = vrot.lane.b32.xlu0 %v326, 96
    %v370 = vpop.permute.xlu0 %369
    %371 = vrot.lane.b32.xlu0 %v331, 96
    %v372 = vpop.permute.xlu0 %371
    %373 = vrot.lane.b32.xlu0 %v336, 96
    %v374 = vpop.permute.xlu0 %373
    %375 = vrot.lane.b32.xlu0 %v341, 96
    %v376 = vpop.permute.xlu0 %375
    %377 = vrot.lane.b32.xlu0 %v346, 96
    %v378 = vpop.permute.xlu0 %377
    %379 = vrot.lane.b32.xlu0 %v351, 96
    %v380 = vpop.permute.xlu0 %379
    %381 = vrot.lane.b32.xlu0 %v356, 96
    %v382 = vpop.permute.xlu0 %381
    %vm383 = vcmask 64512
    %v384 = vsel %vm383, %v321, 0
    %v386 = vsel %vm383, %v326, 0
    %v388 = vsel %vm383, %v331, 0
    %v390 = vsel %vm383, %v336, 0
    %v392 = vsel %vm383, %v341, 0
    %v394 = vsel %vm383, %v346, 0
    %v396 = vsel %vm383, %v351, 0
    %v398 = vsel %vm383, %v356, 0
    %v400 = vsel %vm383, %v368, 0
    %v402 = vsel %vm383, %v370, 0
    %v404 = vsel %vm383, %v372, 0
    %v406 = vsel %vm383, %v374, 0
    %v408 = vsel %vm383, %v376, 0
    %v410 = vsel %vm383, %v378, 0
    %v412 = vsel %vm383, %v380, 0
    %v414 = vsel %vm383, %v382, 0
    %416 = vmatprep.subr.mxu0 0.0
    %417 = vmatpush1.xpose.msra.mxu0 %v400
    %418 = vmatprep.subr.mxu0 0.0
    %419 = vmatpush1.xpose.msra.mxu0 %v402
    %420 = vmatprep.subr.mxu0 0.0
    %421 = vmatpush1.xpose.msra.mxu0 %v404
    %422 = vmatprep.subr.mxu0 0.0
    %423 = vmatpush1.xpose.msra.mxu0 %v406
    %424 = vmatprep.subr.mxu0 0.0
    %425 = vmatpush1.xpose.msra.mxu0 %v408
    %426 = vmatprep.subr.mxu0 0.0
    %427 = vmatpush1.xpose.msra.mxu0 %v410
    %428 = vmatprep.subr.mxu0 0.0
    %429 = vmatpush1.xpose.msra.mxu0 %v412
    %430 = vmatprep.subr.mxu0 0.0
    %431 = vmatpush1.xpose.msra.mxu0 %v414
    %432 = vmatprep.subr.mxu0 0.0
    %433 = vmatpush1.xpose.msra.mxu0 0.0
    %434 = vmatprep.subr.mxu0 0.0
    %435 = vmatpush1.xpose.msra.mxu0 0.0
    %436 = vmatprep.subr.mxu0 0.0
    %437 = vmatpush1.xpose.msra.mxu0 0.0
    %438 = vmatprep.subr.mxu0 0.0
    %439 = vmatpush1.xpose.msra.mxu0 0.0
    %440 = vmatprep.subr.mxu0 0.0
    %441 = vmatpush1.xpose.msra.mxu0 0.0
    %442 = vmatprep.subr.mxu0 0.0
    %443 = vmatpush1.xpose.msra.mxu0 0.0
    %444 = vmatprep.subr.mxu0 0.0
    %445 = vmatpush1.xpose.msra.mxu0 0.0
    %446 = vmatprep.subr.mxu0 0.0
    %447 = vmatpush1.xpose.msra.mxu0 0.0
    %448 = vmatprep.subr.mxu0 0.0
    %449 = vmatpush1.xpose.msra.mxu0 0.0
    %450 = vmatprep.subr.mxu0 0.0
    %451 = vmatpush1.xpose.msra.mxu0 0.0
    %452 = vmatprep.subr.mxu0 0.0
    %453 = vmatpush1.xpose.msra.mxu0 0.0
    %454 = vmatprep.subr.mxu0 0.0
    %455 = vmatpush1.xpose.msra.mxu0 0.0
    %456 = vmatprep.subr.mxu0 0.0
    %457 = vmatpush1.xpose.msra.mxu0 0.0
    %458 = vmatprep.subr.mxu0 0.0
    %459 = vmatpush1.xpose.msra.mxu0 0.0
    %460 = vmatprep.subr.mxu0 0.0
    %461 = vmatpush1.xpose.msra.mxu0 0.0
    %462 = vmatprep.subr.mxu0 0.0
    %463 = vmatpush1.xpose.msra.mxu0 0.0
    %464 = vmatprep.subr.mxu0 0.0
    %465 = vmatpush1.xpose.msra.mxu0 0.0
    %466 = vmatprep.subr.mxu0 0.0
    %467 = vmatpush1.xpose.msra.mxu0 0.0
    %468 = vmatprep.subr.mxu0 0.0
    %469 = vmatpush1.xpose.msra.mxu0 0.0
    %470 = vmatprep.subr.mxu0 0.0
    %471 = vmatpush1.xpose.msra.mxu0 0.0
    %472 = vmatprep.subr.mxu0 0.0
    %473 = vmatpush1.xpose.msra.mxu0 0.0
    %474 = vmatprep.subr.mxu0 0.0
    %475 = vmatpush1.xpose.msra.mxu0 0.0
    %476 = vmatprep.subr.mxu0 0.0
    %477 = vmatpush1.xpose.msra.mxu0 0.0
    %478 = vmatprep.subr.mxu0 0.0
    %479 = vmatpush1.xpose.msra.mxu0 0.0
    %480 = vmatprep.mubr.f32.mxu0 0.0
    %481 = vmatmul.mubr.f32.gmra.mrb[0].mxu0 %v384
    %v482 = vpop.f32.mrb[0].mxu0
    %v483 = vadd.f32 %v64, %v482
    %v484 = vpop.f32.mrb[0].mxu0
    %485 = vmatprep.mubr.f32.mxu0 0.0
    %486 = vmatmul.mubr.f32.gmra.mrb[0].mxu0 %v386
    %v487 = vpop.f32.mrb[0].mxu0
    %v488 = vadd.f32 %v65, %v487
    %v489 = vpop.f32.mrb[0].mxu0
    %490 = vmatprep.mubr.f32.mxu0 0.0
    %491 = vmatmul.mubr.f32.gmra.mrb[0].mxu0 %v388
    %v492 = vpop.f32.mrb[0].mxu0
    %v493 = vadd.f32 %v66, %v492
    %v494 = vpop.f32.mrb[0].mxu0
    %495 = vmatprep.mubr.f32.mxu0 0.0
    %496 = vmatmul.mubr.f32.gmra.mrb[0].mxu0 %v390
    %v497 = vpop.f32.mrb[0].mxu0
    %v498 = vadd.f32 %v67, %v497
    %v499 = vpop.f32.mrb[0].mxu0
    %500 = vmatprep.mubr.f32.mxu0 0.0
    %501 = vmatmul.mubr.f32.gmra.mrb[0].mxu0 %v392
    %v502 = vpop.f32.mrb[0].mxu0
    %v503 = vadd.f32 %v68, %v502
    %v504 = vpop.f32.mrb[0].mxu0
    %505 = vmatprep.mubr.f32.mxu0 0.0
    %506 = vmatmul.mubr.f32.gmra.mrb[0].mxu0 %v394
    %v507 = vpop.f32.mrb[0].mxu0
    %v508 = vadd.f32 %v69, %v507
    %v509 = vpop.f32.mrb[0].mxu0
    %510 = vmatprep.mubr.f32.mxu0 0.0
    %511 = vmatmul.mubr.f32.gmra.mrb[0].mxu0 %v396
    %v512 = vpop.f32.mrb[0].mxu0
    %v513 = vadd.f32 %v70, %v512
    %v514 = vpop.f32.mrb[0].mxu0
    %515 = vmatprep.mubr.f32.mxu0 0.0
    %516 = vmatmul.mubr.f32.gmra.mrb[0].mxu0 %v398
    %v517 = vpop.f32.mrb[0].mxu0
    %v518 = vadd.f32 %v71, %v517
    %v519 = vpop.f32.mrb[0].mxu0
    %520 = vdwg.mxu0
    %vm521 = vcmask 523264
    %v522 = vsel %vm521, %v483, -inf
    %523 = vmax.xlane.f32.xlu0 %v522
    %v524 = vpop.xlane.xlu0 %523
    %v525 = vsel %vm521, %v488, -inf
    %526 = vmax.xlane.f32.xlu0 %v525
    %v527 = vpop.xlane.xlu0 %526
    %v528 = vsel %vm521, %v493, -inf
    %529 = vmax.xlane.f32.xlu0 %v528
    %v530 = vpop.xlane.xlu0 %529
    %v531 = vsel %vm521, %v498, -inf
    %532 = vmax.xlane.f32.xlu0 %v531
    %v533 = vpop.xlane.xlu0 %532
    %v534 = vsel %vm521, %v503, -inf
    %535 = vmax.xlane.f32.xlu0 %v534
    %v536 = vpop.xlane.xlu0 %535
    %v537 = vsel %vm521, %v508, -inf
    %538 = vmax.xlane.f32.xlu0 %v537
    %v539 = vpop.xlane.xlu0 %538
    %v540 = vsel %vm521, %v513, -inf
    %541 = vmax.xlane.f32.xlu0 %v540
    %v542 = vpop.xlane.xlu0 %541
    %v543 = vsel %vm521, %v518, -inf
    %544 = vmax.xlane.f32.xlu0 %v543
    %v545 = vpop.xlane.xlu0 %544
    %v546 = vsub.f32 %v483, %v524
    %v547 = vsub.f32 %v488, %v527
    %v548 = vsub.f32 %v493, %v530
    %v549 = vsub.f32 %v498, %v533
    %v550 = vsub.f32 %v503, %v536
    %v551 = vsub.f32 %v508, %v539
    %v552 = vsub.f32 %v513, %v542
    %v553 = vsub.f32 %v518, %v545
    %v554 = vmul.f32 %v546, 1.442695
    %v555 = vpow.pop %v554
    %v556 = vmul.f32 %v547, 1.442695
    %v557 = vpow.pop %v556
    %v558 = vmul.f32 %v548, 1.442695
    %v559 = vpow.pop %v558
    %v560 = vmul.f32 %v549, 1.442695
    %v561 = vpow.pop %v560
    %v562 = vmul.f32 %v550, 1.442695
    %v563 = vpow.pop %v562
    %v564 = vmul.f32 %v551, 1.442695
    %v565 = vpow.pop %v564
    %v566 = vmul.f32 %v552, 1.442695
    %v567 = vpow.pop %v566
    %v568 = vmul.f32 %v553, 1.442695
    %v569 = vpow.pop %v568
    %v570 = vsel %vm521, %v555, 0.0
    %571 = vadd.xlane.f32.xlu0 %v570
    %v572 = vpop.xlane.xlu0 %571
    %v573 = vsel %vm521, %v557, 0.0
    %574 = vadd.xlane.f32.xlu0 %v573
    %v575 = vpop.xlane.xlu0 %574
    %v576 = vsel %vm521, %v559, 0.0
    %577 = vadd.xlane.f32.xlu0 %v576
    %v578 = vpop.xlane.xlu0 %577
    %v579 = vsel %vm521, %v561, 0.0
    %580 = vadd.xlane.f32.xlu0 %v579
    %v581 = vpop.xlane.xlu0 %580
    %v582 = vsel %vm521, %v563, 0.0
    %583 = vadd.xlane.f32.xlu0 %v582
    %v584 = vpop.xlane.xlu0 %583
    %v585 = vsel %vm521, %v565, 0.0
    %586 = vadd.xlane.f32.xlu0 %v585
    %v587 = vpop.xlane.xlu0 %586
    %v588 = vsel %vm521, %v567, 0.0
    %589 = vadd.xlane.f32.xlu0 %v588
    %v590 = vpop.xlane.xlu0 %589
    %v591 = vsel %vm521, %v569, 0.0
    %592 = vadd.xlane.f32.xlu0 %v591
    %v593 = vpop.xlane.xlu0 %592
    %v594 = vrcp.pop %v572
    %v595 = vrcp.pop %v575
    %v596 = vrcp.pop %v578
    %v597 = vrcp.pop %v581
    %v598 = vrcp.pop %v584
    %v599 = vrcp.pop %v587
    %v600 = vrcp.pop %v590
    %v601 = vrcp.pop %v593
    %v602 = vmul.f32 %v555, %v594
    %v603 = vmul.f32 %v557, %v595
    %v604 = vmul.f32 %v559, %v596
    %v605 = vmul.f32 %v561, %v597
    %v606 = vmul.f32 %v563, %v598
    %v607 = vmul.f32 %v565, %v599
    %v608 = vmul.f32 %v567, %v600
    %v609 = vmul.f32 %v569, %v601
    %610 = vrot.lane.b32.xlu0 %v321, 64
    %v611 = vpop.permute.xlu0 %610
    %612 = vrot.lane.b32.xlu0 %v326, 64
    %v613 = vpop.permute.xlu0 %612
    %614 = vrot.lane.b32.xlu0 %v331, 64
    %v615 = vpop.permute.xlu0 %614
    %616 = vrot.lane.b32.xlu0 %v336, 64
    %v617 = vpop.permute.xlu0 %616
    %618 = vrot.lane.b32.xlu0 %v341, 64
    %v619 = vpop.permute.xlu0 %618
    %620 = vrot.lane.b32.xlu0 %v346, 64
    %v621 = vpop.permute.xlu0 %620
    %622 = vrot.lane.b32.xlu0 %v351, 64
    %v623 = vpop.permute.xlu0 %622
    %624 = vrot.lane.b32.xlu0 %v356, 64
    %v625 = vpop.permute.xlu0 %624
    %v635 = vsel %vm521, %v602, 0
    %v638 = vsel %vm521, %v603, 0
    %v641 = vsel %vm521, %v604, 0
    %v644 = vsel %vm521, %v605, 0
    %v647 = vsel %vm521, %v606, 0
    %v650 = vsel %vm521, %v607, 0
    %v653 = vsel %vm521, %v608, 0
    %v656 = vsel %vm521, %v609, 0
    %658 = vmatprep.subr.mxu0 0.0
    %659 = vmatpush1.msra.mxu0 %v611
    %660 = vmatprep.subr.mxu0 0.0
    %661 = vmatpush1.msra.mxu0 %v613
    %662 = vmatprep.subr.mxu0 0.0
    %663 = vmatpush1.msra.mxu0 %v615
    %664 = vmatprep.subr.mxu0 0.0
    %665 = vmatpush1.msra.mxu0 %v617
    %666 = vmatprep.subr.mxu0 0.0
    %667 = vmatpush1.msra.mxu0 %v619
    %668 = vmatprep.subr.mxu0 0.0
    %669 = vmatpush1.msra.mxu0 %v621
    %670 = vmatprep.subr.mxu0 0.0
    %671 = vmatpush1.msra.mxu0 %v623
    %672 = vmatprep.subr.mxu0 0.0
    %673 = vmatpush1.msra.mxu0 %v625
    %674 = vmatprep.subr.mxu0 0.0
    %675 = vmatpush1.msra.mxu0 0.0
    %676 = vmatprep.subr.mxu0 0.0
    %677 = vmatpush1.msra.mxu0 0.0
    %678 = vmatprep.subr.mxu0 0.0
    %679 = vmatpush1.msra.mxu0 0.0
    %680 = vmatprep.subr.mxu0 0.0
    %681 = vmatpush1.msra.mxu0 0.0
    %682 = vmatprep.subr.mxu0 0.0
    %683 = vmatpush1.msra.mxu0 0.0
    %684 = vmatprep.subr.mxu0 0.0
    %685 = vmatpush1.msra.mxu0 0.0
    %686 = vmatprep.subr.mxu0 0.0
    %687 = vmatpush1.msra.mxu0 0.0
    %688 = vmatprep.subr.mxu0 0.0
    %689 = vmatpush1.msra.mxu0 0.0
    %690 = vmatprep.subr.mxu0 0.0
    %691 = vmatpush1.msra.mxu0 0.0
    %692 = vmatprep.subr.mxu0 0.0
    %693 = vmatpush1.msra.mxu0 0.0
    %694 = vmatprep.subr.mxu0 0.0
    %695 = vmatpush1.msra.mxu0 0.0
    %696 = vmatprep.subr.mxu0 0.0
    %697 = vmatpush1.msra.mxu0 0.0
    %698 = vmatprep.subr.mxu0 0.0
    %699 = vmatpush1.msra.mxu0 0.0
    %700 = vmatprep.subr.mxu0 0.0
    %701 = vmatpush1.msra.mxu0 0.0
    %702 = vmatprep.subr.mxu0 0.0
    %703 = vmatpush1.msra.mxu0 0.0
    %704 = vmatprep.subr.mxu0 0.0
    %705 = vmatpush1.msra.mxu0 0.0
    %706 = vmatprep.subr.mxu0 0.0
    %707 = vmatpush1.msra.mxu0 0.0
    %708 = vmatprep.subr.mxu0 0.0
    %709 = vmatpush1.msra.mxu0 0.0
    %710 = vmatprep.subr.mxu0 0.0
    %711 = vmatpush1.msra.mxu0 0.0
    %712 = vmatprep.subr.mxu0 0.0
    %713 = vmatpush1.msra.mxu0 0.0
    %714 = vmatprep.subr.mxu0 0.0
    %715 = vmatpush1.msra.mxu0 0.0
    %716 = vmatprep.subr.mxu0 0.0
    %717 = vmatpush1.msra.mxu0 0.0
    %718 = vmatprep.subr.mxu0 0.0
    %719 = vmatpush1.msra.mxu0 0.0
    %720 = vmatprep.subr.mxu0 0.0
    %721 = vmatpush1.msra.mxu0 0.0
    %722 = vmatprep.mubr.f32.mxu0 0.0
    %723 = vmatmul.mubr.f32.gmra.mrb[0].mxu0 %v635
    %v724 = vpop.f32.mrb[0].mxu0
    %v725 = vadd.f32 0.0, %v724
    %v726 = vpop.f32.mrb[0].mxu0
    %727 = vmatprep.mubr.f32.mxu0 0.0
    %728 = vmatmul.mubr.f32.gmra.mrb[0].mxu0 %v638
    %v729 = vpop.f32.mrb[0].mxu0
    %v730 = vadd.f32 0.0, %v729
    %v731 = vpop.f32.mrb[0].mxu0
    %732 = vmatprep.mubr.f32.mxu0 0.0
    %733 = vmatmul.mubr.f32.gmra.mrb[0].mxu0 %v641
    %v734 = vpop.f32.mrb[0].mxu0
    %v735 = vadd.f32 0.0, %v734
    %v736 = vpop.f32.mrb[0].mxu0
    %737 = vmatprep.mubr.f32.mxu0 0.0
    %738 = vmatmul.mubr.f32.gmra.mrb[0].mxu0 %v644
    %v739 = vpop.f32.mrb[0].mxu0
    %v740 = vadd.f32 0.0, %v739
    %v741 = vpop.f32.mrb[0].mxu0
    %742 = vmatprep.mubr.f32.mxu0 0.0
    %743 = vmatmul.mubr.f32.gmra.mrb[0].mxu0 %v647
    %v744 = vpop.f32.mrb[0].mxu0
    %v745 = vadd.f32 0.0, %v744
    %v746 = vpop.f32.mrb[0].mxu0
    %747 = vmatprep.mubr.f32.mxu0 0.0
    %748 = vmatmul.mubr.f32.gmra.mrb[0].mxu0 %v650
    %v749 = vpop.f32.mrb[0].mxu0
    %v750 = vadd.f32 0.0, %v749
    %v751 = vpop.f32.mrb[0].mxu0
    %752 = vmatprep.mubr.f32.mxu0 0.0
    %753 = vmatmul.mubr.f32.gmra.mrb[0].mxu0 %v653
    %v754 = vpop.f32.mrb[0].mxu0
    %v755 = vadd.f32 0.0, %v754
    %v756 = vpop.f32.mrb[0].mxu0
    %757 = vmatprep.mubr.f32.mxu0 0.0
    %758 = vmatmul.mubr.f32.gmra.mrb[0].mxu0 %v656
    %v759 = vpop.f32.mrb[0].mxu0
    %v760 = vadd.f32 0.0, %v759
    %v761 = vpop.f32.mrb[0].mxu0
    %762 = vdwg.mxu0
    %763 = vrot.lane.b32.xlu0 %v321, 120
    %v764 = vpop.permute.xlu0 %763
    %765 = vrot.lane.b32.xlu0 %v326, 120
    %v766 = vpop.permute.xlu0 %765
    %767 = vrot.lane.b32.xlu0 %v331, 120
    %v768 = vpop.permute.xlu0 %767
    %769 = vrot.lane.b32.xlu0 %v336, 120
    %v770 = vpop.permute.xlu0 %769
    %771 = vrot.lane.b32.xlu0 %v341, 120
    %v772 = vpop.permute.xlu0 %771
    %773 = vrot.lane.b32.xlu0 %v346, 120
    %v774 = vpop.permute.xlu0 %773
    %775 = vrot.lane.b32.xlu0 %v351, 120
    %v776 = vpop.permute.xlu0 %775
    %777 = vrot.lane.b32.xlu0 %v356, 120
    %v778 = vpop.permute.xlu0 %777
    %779 = vrot.lane.b32.xlu0 %v321, 88
    %v780 = vpop.permute.xlu0 %779
    %781 = vrot.lane.b32.xlu0 %v326, 88
    %v782 = vpop.permute.xlu0 %781
    %783 = vrot.lane.b32.xlu0 %v331, 88
    %v784 = vpop.permute.xlu0 %783
    %785 = vrot.lane.b32.xlu0 %v336, 88
    %v786 = vpop.permute.xlu0 %785
    %787 = vrot.lane.b32.xlu0 %v341, 88
    %v788 = vpop.permute.xlu0 %787
    %789 = vrot.lane.b32.xlu0 %v346, 88
    %v790 = vpop.permute.xlu0 %789
    %791 = vrot.lane.b32.xlu0 %v351, 88
    %v792 = vpop.permute.xlu0 %791
    %793 = vrot.lane.b32.xlu0 %v356, 88
    %v794 = vpop.permute.xlu0 %793
    %v795 = vsel %vm383, %v764, 0
    %v797 = vsel %vm383, %v766, 0
    %v799 = vsel %vm383, %v768, 0
    %v801 = vsel %vm383, %v770, 0
    %v803 = vsel %vm383, %v772, 0
    %v805 = vsel %vm383, %v774, 0
    %v807 = vsel %vm383, %v776, 0
    %v809 = vsel %vm383, %v778, 0
    %v811 = vsel %vm383, %v780, 0
    %v813 = vsel %vm383, %v782, 0
    %v815 = vsel %vm383, %v784, 0
    %v817 = vsel %vm383, %v786, 0
    %v819 = vsel %vm383, %v788, 0
    %v821 = vsel %vm383, %v790, 0
    %v823 = vsel %vm383, %v792, 0
    %v825 = vsel %vm383, %v794, 0
    %827 = vmatprep.subr.mxu0 0.0
    %828 = vmatpush1.xpose.msra.mxu0 %v811
    %829 = vmatprep.subr.mxu0 0.0
    %830 = vmatpush1.xpose.msra.mxu0 %v813
    %831 = vmatprep.subr.mxu0 0.0
    %832 = vmatpush1.xpose.msra.mxu0 %v815
    %833 = vmatprep.subr.mxu0 0.0
    %834 = vmatpush1.xpose.msra.mxu0 %v817
    %835 = vmatprep.subr.mxu0 0.0
    %836 = vmatpush1.xpose.msra.mxu0 %v819
    %837 = vmatprep.subr.mxu0 0.0
    %838 = vmatpush1.xpose.msra.mxu0 %v821
    %839 = vmatprep.subr.mxu0 0.0
    %840 = vmatpush1.xpose.msra.mxu0 %v823
    %841 = vmatprep.subr.mxu0 0.0
    %842 = vmatpush1.xpose.msra.mxu0 %v825
    %843 = vmatprep.subr.mxu0 0.0
    %844 = vmatpush1.xpose.msra.mxu0 0.0
    %845 = vmatprep.subr.mxu0 0.0
    %846 = vmatpush1.xpose.msra.mxu0 0.0
    %847 = vmatprep.subr.mxu0 0.0
    %848 = vmatpush1.xpose.msra.mxu0 0.0
    %849 = vmatprep.subr.mxu0 0.0
    %850 = vmatpush1.xpose.msra.mxu0 0.0
    %851 = vmatprep.subr.mxu0 0.0
    %852 = vmatpush1.xpose.msra.mxu0 0.0
    %853 = vmatprep.subr.mxu0 0.0
    %854 = vmatpush1.xpose.msra.mxu0 0.0
    %855 = vmatprep.subr.mxu0 0.0
    %856 = vmatpush1.xpose.msra.mxu0 0.0
    %857 = vmatprep.subr.mxu0 0.0
    %858 = vmatpush1.xpose.msra.mxu0 0.0
    %859 = vmatprep.subr.mxu0 0.0
    %860 = vmatpush1.xpose.msra.mxu0 0.0
    %861 = vmatprep.subr.mxu0 0.0
    %862 = vmatpush1.xpose.msra.mxu0 0.0
    %863 = vmatprep.subr.mxu0 0.0
    %864 = vmatpush1.xpose.msra.mxu0 0.0
    %865 = vmatprep.subr.mxu0 0.0
    %866 = vmatpush1.xpose.msra.mxu0 0.0
    %867 = vmatprep.subr.mxu0 0.0
    %868 = vmatpush1.xpose.msra.mxu0 0.0
    %869 = vmatprep.subr.mxu0 0.0
    %870 = vmatpush1.xpose.msra.mxu0 0.0
    %871 = vmatprep.subr.mxu0 0.0
    %872 = vmatpush1.xpose.msra.mxu0 0.0
    %873 = vmatprep.subr.mxu0 0.0
    %874 = vmatpush1.xpose.msra.mxu0 0.0
    %875 = vmatprep.subr.mxu0 0.0
    %876 = vmatpush1.xpose.msra.mxu0 0.0
    %877 = vmatprep.subr.mxu0 0.0
    %878 = vmatpush1.xpose.msra.mxu0 0.0
    %879 = vmatprep.subr.mxu0 0.0
    %880 = vmatpush1.xpose.msra.mxu0 0.0
    %881 = vmatprep.subr.mxu0 0.0
    %882 = vmatpush1.xpose.msra.mxu0 0.0
    %883 = vmatprep.subr.mxu0 0.0
    %884 = vmatpush1.xpose.msra.mxu0 0.0
    %885 = vmatprep.subr.mxu0 0.0
    %886 = vmatpush1.xpose.msra.mxu0 0.0
    %887 = vmatprep.subr.mxu0 0.0
    %888 = vmatpush1.xpose.msra.mxu0 0.0
    %889 = vmatprep.subr.mxu0 0.0
    %890 = vmatpush1.xpose.msra.mxu0 0.0
    %891 = vmatprep.mubr.f32.mxu0 0.0
    %892 = vmatmul.mubr.f32.gmra.mrb[0].mxu0 %v795
    %v893 = vpop.f32.mrb[0].mxu0
    %v894 = vadd.f32 %v64, %v893
    %v895 = vpop.f32.mrb[0].mxu0
    %896 = vmatprep.mubr.f32.mxu0 0.0
    %897 = vmatmul.mubr.f32.gmra.mrb[0].mxu0 %v797
    %v898 = vpop.f32.mrb[0].mxu0
    %v899 = vadd.f32 %v65, %v898
    %v900 = vpop.f32.mrb[0].mxu0
    %901 = vmatprep.mubr.f32.mxu0 0.0
    %902 = vmatmul.mubr.f32.gmra.mrb[0].mxu0 %v799
    %v903 = vpop.f32.mrb[0].mxu0
    %v904 = vadd.f32 %v66, %v903
    %v905 = vpop.f32.mrb[0].mxu0
    %906 = vmatprep.mubr.f32.mxu0 0.0
    %907 = vmatmul.mubr.f32.gmra.mrb[0].mxu0 %v801
    %v908 = vpop.f32.mrb[0].mxu0
    %v909 = vadd.f32 %v67, %v908
    %v910 = vpop.f32.mrb[0].mxu0
    %911 = vmatprep.mubr.f32.mxu0 0.0
    %912 = vmatmul.mubr.f32.gmra.mrb[0].mxu0 %v803
    %v913 = vpop.f32.mrb[0].mxu0
    %v914 = vadd.f32 %v68, %v913
    %v915 = vpop.f32.mrb[0].mxu0
    %916 = vmatprep.mubr.f32.mxu0 0.0
    %917 = vmatmul.mubr.f32.gmra.mrb[0].mxu0 %v805
    %v918 = vpop.f32.mrb[0].mxu0
    %v919 = vadd.f32 %v69, %v918
    %v920 = vpop.f32.mrb[0].mxu0
    %921 = vmatprep.mubr.f32.mxu0 0.0
    %922 = vmatmul.mubr.f32.gmra.mrb[0].mxu0 %v807
    %v923 = vpop.f32.mrb[0].mxu0
    %v924 = vadd.f32 %v70, %v923
    %v925 = vpop.f32.mrb[0].mxu0
    %926 = vmatprep.mubr.f32.mxu0 0.0
    %927 = vmatmul.mubr.f32.gmra.mrb[0].mxu0 %v809
    %v928 = vpop.f32.mrb[0].mxu0
    %v929 = vadd.f32 %v71, %v928
    %v930 = vpop.f32.mrb[0].mxu0
    %931 = vdwg.mxu0
    %v932 = vsel %vm521, %v894, -inf
    %933 = vmax.xlane.f32.xlu0 %v932
    %v934 = vpop.xlane.xlu0 %933
    %v935 = vsel %vm521, %v899, -inf
    %936 = vmax.xlane.f32.xlu0 %v935
    %v937 = vpop.xlane.xlu0 %936
    %v938 = vsel %vm521, %v904, -inf
    %939 = vmax.xlane.f32.xlu0 %v938
    %v940 = vpop.xlane.xlu0 %939
    %v941 = vsel %vm521, %v909, -inf
    %942 = vmax.xlane.f32.xlu0 %v941
    %v943 = vpop.xlane.xlu0 %942
    %v944 = vsel %vm521, %v914, -inf
    %945 = vmax.xlane.f32.xlu0 %v944
    %v946 = vpop.xlane.xlu0 %945
    %v947 = vsel %vm521, %v919, -inf
    %948 = vmax.xlane.f32.xlu0 %v947
    %v949 = vpop.xlane.xlu0 %948
    %v950 = vsel %vm521, %v924, -inf
    %951 = vmax.xlane.f32.xlu0 %v950
    %v952 = vpop.xlane.xlu0 %951
    %v953 = vsel %vm521, %v929, -inf
    %954 = vmax.xlane.f32.xlu0 %v953
    %v955 = vpop.xlane.xlu0 %954
    %v956 = vsub.f32 %v894, %v934
    %v957 = vsub.f32 %v899, %v937
    %v958 = vsub.f32 %v904, %v940
    %v959 = vsub.f32 %v909, %v943
    %v960 = vsub.f32 %v914, %v946
    %v961 = vsub.f32 %v919, %v949
    %v962 = vsub.f32 %v924, %v952
    %v963 = vsub.f32 %v929, %v955
    %v964 = vmul.f32 %v956, 1.442695
    %v965 = vpow.pop %v964
    %v966 = vmul.f32 %v957, 1.442695
    %v967 = vpow.pop %v966
    %v968 = vmul.f32 %v958, 1.442695
    %v969 = vpow.pop %v968
    %v970 = vmul.f32 %v959, 1.442695
    %v971 = vpow.pop %v970
    %v972 = vmul.f32 %v960, 1.442695
    %v973 = vpow.pop %v972
    %v974 = vmul.f32 %v961, 1.442695
    %v975 = vpow.pop %v974
    %v976 = vmul.f32 %v962, 1.442695
    %v977 = vpow.pop %v976
    %v978 = vmul.f32 %v963, 1.442695
    %v979 = vpow.pop %v978
    %v980 = vsel %vm521, %v965, 0.0
    %981 = vadd.xlane.f32.xlu0 %v980
    %v982 = vpop.xlane.xlu0 %981
    %v983 = vsel %vm521, %v967, 0.0
    %984 = vadd.xlane.f32.xlu0 %v983
    %v985 = vpop.xlane.xlu0 %984
    %v986 = vsel %vm521, %v969, 0.0
    %987 = vadd.xlane.f32.xlu0 %v986
    %v988 = vpop.xlane.xlu0 %987
    %v989 = vsel %vm521, %v971, 0.0
    %990 = vadd.xlane.f32.xlu0 %v989
    %v991 = vpop.xlane.xlu0 %990
    %v992 = vsel %vm521, %v973, 0.0
    %993 = vadd.xlane.f32.xlu0 %v992
    %v994 = vpop.xlane.xlu0 %993
    %v995 = vsel %vm521, %v975, 0.0
    %996 = vadd.xlane.f32.xlu0 %v995
    %v997 = vpop.xlane.xlu0 %996
    %v998 = vsel %vm521, %v977, 0.0
    %999 = vadd.xlane.f32.xlu0 %v998
    %v1000 = vpop.xlane.xlu0 %999
    %v1001 = vsel %vm521, %v979, 0.0
    %1002 = vadd.xlane.f32.xlu0 %v1001
    %v1003 = vpop.xlane.xlu0 %1002
    %v1004 = vrcp.pop %v982
    %v1005 = vrcp.pop %v985
    %v1006 = vrcp.pop %v988
    %v1007 = vrcp.pop %v991
    %v1008 = vrcp.pop %v994
    %v1009 = vrcp.pop %v997
    %v1010 = vrcp.pop %v1000
    %v1011 = vrcp.pop %v1003
    %v1012 = vmul.f32 %v965, %v1004
    %v1013 = vmul.f32 %v967, %v1005
    %v1014 = vmul.f32 %v969, %v1006
    %v1015 = vmul.f32 %v971, %v1007
    %v1016 = vmul.f32 %v973, %v1008
    %v1017 = vmul.f32 %v975, %v1009
    %v1018 = vmul.f32 %v977, %v1010
    %v1019 = vmul.f32 %v979, %v1011
    %1020 = vrot.lane.b32.xlu0 %v321, 56
    %v1021 = vpop.permute.xlu0 %1020
    %1022 = vrot.lane.b32.xlu0 %v326, 56
    %v1023 = vpop.permute.xlu0 %1022
    %1024 = vrot.lane.b32.xlu0 %v331, 56
    %v1025 = vpop.permute.xlu0 %1024
    %1026 = vrot.lane.b32.xlu0 %v336, 56
    %v1027 = vpop.permute.xlu0 %1026
    %1028 = vrot.lane.b32.xlu0 %v341, 56
    %v1029 = vpop.permute.xlu0 %1028
    %1030 = vrot.lane.b32.xlu0 %v346, 56
    %v1031 = vpop.permute.xlu0 %1030
    %1032 = vrot.lane.b32.xlu0 %v351, 56
    %v1033 = vpop.permute.xlu0 %1032
    %1034 = vrot.lane.b32.xlu0 %v356, 56
    %v1035 = vpop.permute.xlu0 %1034
    %v1045 = vsel %vm521, %v1012, 0
    %v1048 = vsel %vm521, %v1013, 0
    %v1051 = vsel %vm521, %v1014, 0
    %v1054 = vsel %vm521, %v1015, 0
    %v1057 = vsel %vm521, %v1016, 0
    %v1060 = vsel %vm521, %v1017, 0
    %v1063 = vsel %vm521, %v1018, 0
    %v1066 = vsel %vm521, %v1019, 0
    %1068 = vmatprep.subr.mxu0 0.0
    %1069 = vmatpush1.msra.mxu0 %v1021
    %1070 = vmatprep.subr.mxu0 0.0
    %1071 = vmatpush1.msra.mxu0 %v1023
    %1072 = vmatprep.subr.mxu0 0.0
    %1073 = vmatpush1.msra.mxu0 %v1025
    %1074 = vmatprep.subr.mxu0 0.0
    %1075 = vmatpush1.msra.mxu0 %v1027
    %1076 = vmatprep.subr.mxu0 0.0
    %1077 = vmatpush1.msra.mxu0 %v1029
    %1078 = vmatprep.subr.mxu0 0.0
    %1079 = vmatpush1.msra.mxu0 %v1031
    %1080 = vmatprep.subr.mxu0 0.0
    %1081 = vmatpush1.msra.mxu0 %v1033
    %1082 = vmatprep.subr.mxu0 0.0
    %1083 = vmatpush1.msra.mxu0 %v1035
    %1084 = vmatprep.subr.mxu0 0.0
    %1085 = vmatpush1.msra.mxu0 0.0
    %1086 = vmatprep.subr.mxu0 0.0
    %1087 = vmatpush1.msra.mxu0 0.0
    %1088 = vmatprep.subr.mxu0 0.0
    %1089 = vmatpush1.msra.mxu0 0.0
    %1090 = vmatprep.subr.mxu0 0.0
    %1091 = vmatpush1.msra.mxu0 0.0
    %1092 = vmatprep.subr.mxu0 0.0
    %1093 = vmatpush1.msra.mxu0 0.0
    %1094 = vmatprep.subr.mxu0 0.0
    %1095 = vmatpush1.msra.mxu0 0.0
    %1096 = vmatprep.subr.mxu0 0.0
    %1097 = vmatpush1.msra.mxu0 0.0
    %1098 = vmatprep.subr.mxu0 0.0
    %1099 = vmatpush1.msra.mxu0 0.0
    %1100 = vmatprep.subr.mxu0 0.0
    %1101 = vmatpush1.msra.mxu0 0.0
    %1102 = vmatprep.subr.mxu0 0.0
    %1103 = vmatpush1.msra.mxu0 0.0
    %1104 = vmatprep.subr.mxu0 0.0
    %1105 = vmatpush1.msra.mxu0 0.0
    %1106 = vmatprep.subr.mxu0 0.0
    %1107 = vmatpush1.msra.mxu0 0.0
    %1108 = vmatprep.subr.mxu0 0.0
    %1109 = vmatpush1.msra.mxu0 0.0
    %1110 = vmatprep.subr.mxu0 0.0
    %1111 = vmatpush1.msra.mxu0 0.0
    %1112 = vmatprep.subr.mxu0 0.0
    %1113 = vmatpush1.msra.mxu0 0.0
    %1114 = vmatprep.subr.mxu0 0.0
    %1115 = vmatpush1.msra.mxu0 0.0
    %1116 = vmatprep.subr.mxu0 0.0
    %1117 = vmatpush1.msra.mxu0 0.0
    %1118 = vmatprep.subr.mxu0 0.0
    %1119 = vmatpush1.msra.mxu0 0.0
    %1120 = vmatprep.subr.mxu0 0.0
    %1121 = vmatpush1.msra.mxu0 0.0
    %1122 = vmatprep.subr.mxu0 0.0
    %1123 = vmatpush1.msra.mxu0 0.0
    %1124 = vmatprep.subr.mxu0 0.0
    %1125 = vmatpush1.msra.mxu0 0.0
    %1126 = vmatprep.subr.mxu0 0.0
    %1127 = vmatpush1.msra.mxu0 0.0
    %1128 = vmatprep.subr.mxu0 0.0
    %1129 = vmatpush1.msra.mxu0 0.0
    %1130 = vmatprep.subr.mxu0 0.0
    %1131 = vmatpush1.msra.mxu0 0.0
    %1132 = vmatprep.mubr.f32.mxu0 0.0
    %1133 = vmatmul.mubr.f32.gmra.mrb[0].mxu0 %v1045
    %v1134 = vpop.f32.mrb[0].mxu0
    %v1135 = vadd.f32 0.0, %v1134
    %v1136 = vpop.f32.mrb[0].mxu0
    %1137 = vmatprep.mubr.f32.mxu0 0.0
    %1138 = vmatmul.mubr.f32.gmra.mrb[0].mxu0 %v1048
    %v1139 = vpop.f32.mrb[0].mxu0
    %v1140 = vadd.f32 0.0, %v1139
    %v1141 = vpop.f32.mrb[0].mxu0
    %1142 = vmatprep.mubr.f32.mxu0 0.0
    %1143 = vmatmul.mubr.f32.gmra.mrb[0].mxu0 %v1051
    %v1144 = vpop.f32.mrb[0].mxu0
    %v1145 = vadd.f32 0.0, %v1144
    %v1146 = vpop.f32.mrb[0].mxu0
    %1147 = vmatprep.mubr.f32.mxu0 0.0
    %1148 = vmatmul.mubr.f32.gmra.mrb[0].mxu0 %v1054
    %v1149 = vpop.f32.mrb[0].mxu0
    %v1150 = vadd.f32 0.0, %v1149
    %v1151 = vpop.f32.mrb[0].mxu0
    %1152 = vmatprep.mubr.f32.mxu0 0.0
    %1153 = vmatmul.mubr.f32.gmra.mrb[0].mxu0 %v1057
    %v1154 = vpop.f32.mrb[0].mxu0
    %v1155 = vadd.f32 0.0, %v1154
    %v1156 = vpop.f32.mrb[0].mxu0
    %1157 = vmatprep.mubr.f32.mxu0 0.0
    %1158 = vmatmul.mubr.f32.gmra.mrb[0].mxu0 %v1060
    %v1159 = vpop.f32.mrb[0].mxu0
    %v1160 = vadd.f32 0.0, %v1159
    %v1161 = vpop.f32.mrb[0].mxu0
    %1162 = vmatprep.mubr.f32.mxu0 0.0
    %1163 = vmatmul.mubr.f32.gmra.mrb[0].mxu0 %v1063
    %v1164 = vpop.f32.mrb[0].mxu0
    %v1165 = vadd.f32 0.0, %v1164
    %v1166 = vpop.f32.mrb[0].mxu0
    %1167 = vmatprep.mubr.f32.mxu0 0.0
    %1168 = vmatmul.mubr.f32.gmra.mrb[0].mxu0 %v1066
    %v1169 = vpop.f32.mrb[0].mxu0
    %v1170 = vadd.f32 0.0, %v1169
    %v1171 = vpop.f32.mrb[0].mxu0
    %1172 = vdwg.mxu0
    %1173 = vrot.lane.b32.xlu0 %v321, 112
    %v1174 = vpop.permute.xlu0 %1173
    %1175 = vrot.lane.b32.xlu0 %v326, 112
    %v1176 = vpop.permute.xlu0 %1175
    %1177 = vrot.lane.b32.xlu0 %v331, 112
    %v1178 = vpop.permute.xlu0 %1177
    %1179 = vrot.lane.b32.xlu0 %v336, 112
    %v1180 = vpop.permute.xlu0 %1179
    %1181 = vrot.lane.b32.xlu0 %v341, 112
    %v1182 = vpop.permute.xlu0 %1181
    %1183 = vrot.lane.b32.xlu0 %v346, 112
    %v1184 = vpop.permute.xlu0 %1183
    %1185 = vrot.lane.b32.xlu0 %v351, 112
    %v1186 = vpop.permute.xlu0 %1185
    %1187 = vrot.lane.b32.xlu0 %v356, 112
    %v1188 = vpop.permute.xlu0 %1187
    %1189 = vrot.lane.b32.xlu0 %v321, 80
    %v1190 = vpop.permute.xlu0 %1189
    %1191 = vrot.lane.b32.xlu0 %v326, 80
    %v1192 = vpop.permute.xlu0 %1191
    %1193 = vrot.lane.b32.xlu0 %v331, 80
    %v1194 = vpop.permute.xlu0 %1193
    %1195 = vrot.lane.b32.xlu0 %v336, 80
    %v1196 = vpop.permute.xlu0 %1195
    %1197 = vrot.lane.b32.xlu0 %v341, 80
    %v1198 = vpop.permute.xlu0 %1197
    %1199 = vrot.lane.b32.xlu0 %v346, 80
    %v1200 = vpop.permute.xlu0 %1199
    %1201 = vrot.lane.b32.xlu0 %v351, 80
    %v1202 = vpop.permute.xlu0 %1201
    %1203 = vrot.lane.b32.xlu0 %v356, 80
    %v1204 = vpop.permute.xlu0 %1203
    %v1205 = vsel %vm383, %v1174, 0
    %v1207 = vsel %vm383, %v1176, 0
    %v1209 = vsel %vm383, %v1178, 0
    %v1211 = vsel %vm383, %v1180, 0
    %v1213 = vsel %vm383, %v1182, 0
    %v1215 = vsel %vm383, %v1184, 0
    %v1217 = vsel %vm383, %v1186, 0
    %v1219 = vsel %vm383, %v1188, 0
    %v1221 = vsel %vm383, %v1190, 0
    %v1223 = vsel %vm383, %v1192, 0
    %v1225 = vsel %vm383, %v1194, 0
    %v1227 = vsel %vm383, %v1196, 0
    %v1229 = vsel %vm383, %v1198, 0
    %v1231 = vsel %vm383, %v1200, 0
    %v1233 = vsel %vm383, %v1202, 0
    %v1235 = vsel %vm383, %v1204, 0
    %1237 = vmatprep.subr.mxu0 0.0
    %1238 = vmatpush1.xpose.msra.mxu0 %v1221
    %1239 = vmatprep.subr.mxu0 0.0
    %1240 = vmatpush1.xpose.msra.mxu0 %v1223
    %1241 = vmatprep.subr.mxu0 0.0
    %1242 = vmatpush1.xpose.msra.mxu0 %v1225
    %1243 = vmatprep.subr.mxu0 0.0
    %1244 = vmatpush1.xpose.msra.mxu0 %v1227
    %1245 = vmatprep.subr.mxu0 0.0
    %1246 = vmatpush1.xpose.msra.mxu0 %v1229
    %1247 = vmatprep.subr.mxu0 0.0
    %1248 = vmatpush1.xpose.msra.mxu0 %v1231
    %1249 = vmatprep.subr.mxu0 0.0
    %1250 = vmatpush1.xpose.msra.mxu0 %v1233
    %1251 = vmatprep.subr.mxu0 0.0
    %1252 = vmatpush1.xpose.msra.mxu0 %v1235
    %1253 = vmatprep.subr.mxu0 0.0
    %1254 = vmatpush1.xpose.msra.mxu0 0.0
    %1255 = vmatprep.subr.mxu0 0.0
    %1256 = vmatpush1.xpose.msra.mxu0 0.0
    %1257 = vmatprep.subr.mxu0 0.0
    %1258 = vmatpush1.xpose.msra.mxu0 0.0
    %1259 = vmatprep.subr.mxu0 0.0
    %1260 = vmatpush1.xpose.msra.mxu0 0.0
    %1261 = vmatprep.subr.mxu0 0.0
    %1262 = vmatpush1.xpose.msra.mxu0 0.0
    %1263 = vmatprep.subr.mxu0 0.0
    %1264 = vmatpush1.xpose.msra.mxu0 0.0
    %1265 = vmatprep.subr.mxu0 0.0
    %1266 = vmatpush1.xpose.msra.mxu0 0.0
    %1267 = vmatprep.subr.mxu0 0.0
    %1268 = vmatpush1.xpose.msra.mxu0 0.0
    %1269 = vmatprep.subr.mxu0 0.0
    %1270 = vmatpush1.xpose.msra.mxu0 0.0
    %1271 = vmatprep.subr.mxu0 0.0
    %1272 = vmatpush1.xpose.msra.mxu0 0.0
    %1273 = vmatprep.subr.mxu0 0.0
    %1274 = vmatpush1.xpose.msra.mxu0 0.0
    %1275 = vmatprep.subr.mxu0 0.0
    %1276 = vmatpush1.xpose.msra.mxu0 0.0
    %1277 = vmatprep.subr.mxu0 0.0
    %1278 = vmatpush1.xpose.msra.mxu0 0.0
    %1279 = vmatprep.subr.mxu0 0.0
    %1280 = vmatpush1.xpose.msra.mxu0 0.0
    %1281 = vmatprep.subr.mxu0 0.0
    %1282 = vmatpush1.xpose.msra.mxu0 0.0
    %1283 = vmatprep.subr.mxu0 0.0
    %1284 = vmatpush1.xpose.msra.mxu0 0.0
    %1285 = vmatprep.subr.mxu0 0.0
    %1286 = vmatpush1.xpose.msra.mxu0 0.0
    %1287 = vmatprep.subr.mxu0 0.0
    %1288 = vmatpush1.xpose.msra.mxu0 0.0
    %1289 = vmatprep.subr.mxu0 0.0
    %1290 = vmatpush1.xpose.msra.mxu0 0.0
    %1291 = vmatprep.subr.mxu0 0.0
    %1292 = vmatpush1.xpose.msra.mxu0 0.0
    %1293 = vmatprep.subr.mxu0 0.0
    %1294 = vmatpush1.xpose.msra.mxu0 0.0
    %1295 = vmatprep.subr.mxu0 0.0
    %1296 = vmatpush1.xpose.msra.mxu0 0.0
    %1297 = vmatprep.subr.mxu0 0.0
    %1298 = vmatpush1.xpose.msra.mxu0 0.0
    %1299 = vmatprep.subr.mxu0 0.0
    %1300 = vmatpush1.xpose.msra.mxu0 0.0
    %1301 = vmatprep.mubr.f32.mxu0 0.0
    %1302 = vmatmul.mubr.f32.gmra.mrb[0].mxu0 %v1205
    %v1303 = vpop.f32.mrb[0].mxu0
    %v1304 = vadd.f32 %v64, %v1303
    %v1305 = vpop.f32.mrb[0].mxu0
    %1306 = vmatprep.mubr.f32.mxu0 0.0
    %1307 = vmatmul.mubr.f32.gmra.mrb[0].mxu0 %v1207
    %v1308 = vpop.f32.mrb[0].mxu0
    %v1309 = vadd.f32 %v65, %v1308
    %v1310 = vpop.f32.mrb[0].mxu0
    %1311 = vmatprep.mubr.f32.mxu0 0.0
    %1312 = vmatmul.mubr.f32.gmra.mrb[0].mxu0 %v1209
    %v1313 = vpop.f32.mrb[0].mxu0
    %v1314 = vadd.f32 %v66, %v1313
    %v1315 = vpop.f32.mrb[0].mxu0
    %1316 = vmatprep.mubr.f32.mxu0 0.0
    %1317 = vmatmul.mubr.f32.gmra.mrb[0].mxu0 %v1211
    %v1318 = vpop.f32.mrb[0].mxu0
    %v1319 = vadd.f32 %v67, %v1318
    %v1320 = vpop.f32.mrb[0].mxu0
    %1321 = vmatprep.mubr.f32.mxu0 0.0
    %1322 = vmatmul.mubr.f32.gmra.mrb[0].mxu0 %v1213
    %v1323 = vpop.f32.mrb[0].mxu0
    %v1324 = vadd.f32 %v68, %v1323
    %v1325 = vpop.f32.mrb[0].mxu0
    %1326 = vmatprep.mubr.f32.mxu0 0.0
    %1327 = vmatmul.mubr.f32.gmra.mrb[0].mxu0 %v1215
    %v1328 = vpop.f32.mrb[0].mxu0
    %v1329 = vadd.f32 %v69, %v1328
    %v1330 = vpop.f32.mrb[0].mxu0
    %1331 = vmatprep.mubr.f32.mxu0 0.0
    %1332 = vmatmul.mubr.f32.gmra.mrb[0].mxu0 %v1217
    %v1333 = vpop.f32.mrb[0].mxu0
    %v1334 = vadd.f32 %v70, %v1333
    %v1335 = vpop.f32.mrb[0].mxu0
    %1336 = vmatprep.mubr.f32.mxu0 0.0
    %1337 = vmatmul.mubr.f32.gmra.mrb[0].mxu0 %v1219
    %v1338 = vpop.f32.mrb[0].mxu0
    %v1339 = vadd.f32 %v71, %v1338
    %v1340 = vpop.f32.mrb[0].mxu0
    %1341 = vdwg.mxu0
    %v1342 = vsel %vm521, %v1304, -inf
    %1343 = vmax.xlane.f32.xlu0 %v1342
    %v1344 = vpop.xlane.xlu0 %1343
    %v1345 = vsel %vm521, %v1309, -inf
    %1346 = vmax.xlane.f32.xlu0 %v1345
    %v1347 = vpop.xlane.xlu0 %1346
    %v1348 = vsel %vm521, %v1314, -inf
    %1349 = vmax.xlane.f32.xlu0 %v1348
    %v1350 = vpop.xlane.xlu0 %1349
    %v1351 = vsel %vm521, %v1319, -inf
    %1352 = vmax.xlane.f32.xlu0 %v1351
    %v1353 = vpop.xlane.xlu0 %1352
    %v1354 = vsel %vm521, %v1324, -inf
    %1355 = vmax.xlane.f32.xlu0 %v1354
    %v1356 = vpop.xlane.xlu0 %1355
    %v1357 = vsel %vm521, %v1329, -inf
    %1358 = vmax.xlane.f32.xlu0 %v1357
    %v1359 = vpop.xlane.xlu0 %1358
    %v1360 = vsel %vm521, %v1334, -inf
    %1361 = vmax.xlane.f32.xlu0 %v1360
    %v1362 = vpop.xlane.xlu0 %1361
    %v1363 = vsel %vm521, %v1339, -inf
    %1364 = vmax.xlane.f32.xlu0 %v1363
    %v1365 = vpop.xlane.xlu0 %1364
    %v1366 = vsub.f32 %v1304, %v1344
    %v1367 = vsub.f32 %v1309, %v1347
    %v1368 = vsub.f32 %v1314, %v1350
    %v1369 = vsub.f32 %v1319, %v1353
    %v1370 = vsub.f32 %v1324, %v1356
    %v1371 = vsub.f32 %v1329, %v1359
    %v1372 = vsub.f32 %v1334, %v1362
    %v1373 = vsub.f32 %v1339, %v1365
    %v1374 = vmul.f32 %v1366, 1.442695
    %v1375 = vpow.pop %v1374
    %v1376 = vmul.f32 %v1367, 1.442695
    %v1377 = vpow.pop %v1376
    %v1378 = vmul.f32 %v1368, 1.442695
    %v1379 = vpow.pop %v1378
    %v1380 = vmul.f32 %v1369, 1.442695
    %v1381 = vpow.pop %v1380
    %v1382 = vmul.f32 %v1370, 1.442695
    %v1383 = vpow.pop %v1382
    %v1384 = vmul.f32 %v1371, 1.442695
    %v1385 = vpow.pop %v1384
    %v1386 = vmul.f32 %v1372, 1.442695
    %v1387 = vpow.pop %v1386
    %v1388 = vmul.f32 %v1373, 1.442695
    %v1389 = vpow.pop %v1388
    %v1390 = vsel %vm521, %v1375, 0.0
    %1391 = vadd.xlane.f32.xlu0 %v1390
    %v1392 = vpop.xlane.xlu0 %1391
    %v1393 = vsel %vm521, %v1377, 0.0
    %1394 = vadd.xlane.f32.xlu0 %v1393
    %v1395 = vpop.xlane.xlu0 %1394
    %v1396 = vsel %vm521, %v1379, 0.0
    %1397 = vadd.xlane.f32.xlu0 %v1396
    %v1398 = vpop.xlane.xlu0 %1397
    %v1399 = vsel %vm521, %v1381, 0.0
    %1400 = vadd.xlane.f32.xlu0 %v1399
    %v1401 = vpop.xlane.xlu0 %1400
    %v1402 = vsel %vm521, %v1383, 0.0
    %1403 = vadd.xlane.f32.xlu0 %v1402
    %v1404 = vpop.xlane.xlu0 %1403
    %v1405 = vsel %vm521, %v1385, 0.0
    %1406 = vadd.xlane.f32.xlu0 %v1405
    %v1407 = vpop.xlane.xlu0 %1406
    %v1408 = vsel %vm521, %v1387, 0.0
    %1409 = vadd.xlane.f32.xlu0 %v1408
    %v1410 = vpop.xlane.xlu0 %1409
    %v1411 = vsel %vm521, %v1389, 0.0
    %1412 = vadd.xlane.f32.xlu0 %v1411
    %v1413 = vpop.xlane.xlu0 %1412
    %v1414 = vrcp.pop %v1392
    %v1415 = vrcp.pop %v1395
    %v1416 = vrcp.pop %v1398
    %v1417 = vrcp.pop %v1401
    %v1418 = vrcp.pop %v1404
    %v1419 = vrcp.pop %v1407
    %v1420 = vrcp.pop %v1410
    %v1421 = vrcp.pop %v1413
    %v1422 = vmul.f32 %v1375, %v1414
    %v1423 = vmul.f32 %v1377, %v1415
    %v1424 = vmul.f32 %v1379, %v1416
    %v1425 = vmul.f32 %v1381, %v1417
    %v1426 = vmul.f32 %v1383, %v1418
    %v1427 = vmul.f32 %v1385, %v1419
    %v1428 = vmul.f32 %v1387, %v1420
    %v1429 = vmul.f32 %v1389, %v1421
    %1430 = vrot.lane.b32.xlu0 %v321, 48
    %v1431 = vpop.permute.xlu0 %1430
    %1432 = vrot.lane.b32.xlu0 %v326, 48
    %v1433 = vpop.permute.xlu0 %1432
    %1434 = vrot.lane.b32.xlu0 %v331, 48
    %v1435 = vpop.permute.xlu0 %1434
    %1436 = vrot.lane.b32.xlu0 %v336, 48
    %v1437 = vpop.permute.xlu0 %1436
    %1438 = vrot.lane.b32.xlu0 %v341, 48
    %v1439 = vpop.permute.xlu0 %1438
    %1440 = vrot.lane.b32.xlu0 %v346, 48
    %v1441 = vpop.permute.xlu0 %1440
    %1442 = vrot.lane.b32.xlu0 %v351, 48
    %v1443 = vpop.permute.xlu0 %1442
    %1444 = vrot.lane.b32.xlu0 %v356, 48
    %v1445 = vpop.permute.xlu0 %1444
    %v1455 = vsel %vm521, %v1422, 0
    %v1458 = vsel %vm521, %v1423, 0
    %v1461 = vsel %vm521, %v1424, 0
    %v1464 = vsel %vm521, %v1425, 0
    %v1467 = vsel %vm521, %v1426, 0
    %v1470 = vsel %vm521, %v1427, 0
    %v1473 = vsel %vm521, %v1428, 0
    %v1476 = vsel %vm521, %v1429, 0
    %1478 = vmatprep.subr.mxu0 0.0
    %1479 = vmatpush1.msra.mxu0 %v1431
    %1480 = vmatprep.subr.mxu0 0.0
    %1481 = vmatpush1.msra.mxu0 %v1433
    %1482 = vmatprep.subr.mxu0 0.0
    %1483 = vmatpush1.msra.mxu0 %v1435
    %1484 = vmatprep.subr.mxu0 0.0
    %1485 = vmatpush1.msra.mxu0 %v1437
    %1486 = vmatprep.subr.mxu0 0.0
    %1487 = vmatpush1.msra.mxu0 %v1439
    %1488 = vmatprep.subr.mxu0 0.0
    %1489 = vmatpush1.msra.mxu0 %v1441
    %1490 = vmatprep.subr.mxu0 0.0
    %1491 = vmatpush1.msra.mxu0 %v1443
    %1492 = vmatprep.subr.mxu0 0.0
    %1493 = vmatpush1.msra.mxu0 %v1445
    %1494 = vmatprep.subr.mxu0 0.0
    %1495 = vmatpush1.msra.mxu0 0.0
    %1496 = vmatprep.subr.mxu0 0.0
    %1497 = vmatpush1.msra.mxu0 0.0
    %1498 = vmatprep.subr.mxu0 0.0
    %1499 = vmatpush1.msra.mxu0 0.0
    %1500 = vmatprep.subr.mxu0 0.0
    %1501 = vmatpush1.msra.mxu0 0.0
    %1502 = vmatprep.subr.mxu0 0.0
    %1503 = vmatpush1.msra.mxu0 0.0
    %1504 = vmatprep.subr.mxu0 0.0
    %1505 = vmatpush1.msra.mxu0 0.0
    %1506 = vmatprep.subr.mxu0 0.0
    %1507 = vmatpush1.msra.mxu0 0.0
    %1508 = vmatprep.subr.mxu0 0.0
    %1509 = vmatpush1.msra.mxu0 0.0
    %1510 = vmatprep.subr.mxu0 0.0
    %1511 = vmatpush1.msra.mxu0 0.0
    %1512 = vmatprep.subr.mxu0 0.0
    %1513 = vmatpush1.msra.mxu0 0.0
    %1514 = vmatprep.subr.mxu0 0.0
    %1515 = vmatpush1.msra.mxu0 0.0
    %1516 = vmatprep.subr.mxu0 0.0
    %1517 = vmatpush1.msra.mxu0 0.0
    %1518 = vmatprep.subr.mxu0 0.0
    %1519 = vmatpush1.msra.mxu0 0.0
    %1520 = vmatprep.subr.mxu0 0.0
    %1521 = vmatpush1.msra.mxu0 0.0
    %1522 = vmatprep.subr.mxu0 0.0
    %1523 = vmatpush1.msra.mxu0 0.0
    %1524 = vmatprep.subr.mxu0 0.0
    %1525 = vmatpush1.msra.mxu0 0.0
    %1526 = vmatprep.subr.mxu0 0.0
    %1527 = vmatpush1.msra.mxu0 0.0
    %1528 = vmatprep.subr.mxu0 0.0
    %1529 = vmatpush1.msra.mxu0 0.0
    %1530 = vmatprep.subr.mxu0 0.0
    %1531 = vmatpush1.msra.mxu0 0.0
    %1532 = vmatprep.subr.mxu0 0.0
    %1533 = vmatpush1.msra.mxu0 0.0
    %1534 = vmatprep.subr.mxu0 0.0
    %1535 = vmatpush1.msra.mxu0 0.0
    %1536 = vmatprep.subr.mxu0 0.0
    %1537 = vmatpush1.msra.mxu0 0.0
    %1538 = vmatprep.subr.mxu0 0.0
    %1539 = vmatpush1.msra.mxu0 0.0
    %1540 = vmatprep.subr.mxu0 0.0
    %1541 = vmatpush1.msra.mxu0 0.0
    %1542 = vmatprep.mubr.f32.mxu0 0.0
    %1543 = vmatmul.mubr.f32.gmra.mrb[0].mxu0 %v1455
    %v1544 = vpop.f32.mrb[0].mxu0
    %v1545 = vadd.f32 0.0, %v1544
    %v1546 = vpop.f32.mrb[0].mxu0
    %1547 = vmatprep.mubr.f32.mxu0 0.0
    %1548 = vmatmul.mubr.f32.gmra.mrb[0].mxu0 %v1458
    %v1549 = vpop.f32.mrb[0].mxu0
    %v1550 = vadd.f32 0.0, %v1549
    %v1551 = vpop.f32.mrb[0].mxu0
    %1552 = vmatprep.mubr.f32.mxu0 0.0
    %1553 = vmatmul.mubr.f32.gmra.mrb[0].mxu0 %v1461
    %v1554 = vpop.f32.mrb[0].mxu0
    %v1555 = vadd.f32 0.0, %v1554
    %v1556 = vpop.f32.mrb[0].mxu0
    %1557 = vmatprep.mubr.f32.mxu0 0.0
    %1558 = vmatmul.mubr.f32.gmra.mrb[0].mxu0 %v1464
    %v1559 = vpop.f32.mrb[0].mxu0
    %v1560 = vadd.f32 0.0, %v1559
    %v1561 = vpop.f32.mrb[0].mxu0
    %1562 = vmatprep.mubr.f32.mxu0 0.0
    %1563 = vmatmul.mubr.f32.gmra.mrb[0].mxu0 %v1467
    %v1564 = vpop.f32.mrb[0].mxu0
    %v1565 = vadd.f32 0.0, %v1564
    %v1566 = vpop.f32.mrb[0].mxu0
    %1567 = vmatprep.mubr.f32.mxu0 0.0
    %1568 = vmatmul.mubr.f32.gmra.mrb[0].mxu0 %v1470
    %v1569 = vpop.f32.mrb[0].mxu0
    %v1570 = vadd.f32 0.0, %v1569
    %v1571 = vpop.f32.mrb[0].mxu0
    %1572 = vmatprep.mubr.f32.mxu0 0.0
    %1573 = vmatmul.mubr.f32.gmra.mrb[0].mxu0 %v1473
    %v1574 = vpop.f32.mrb[0].mxu0
    %v1575 = vadd.f32 0.0, %v1574
    %v1576 = vpop.f32.mrb[0].mxu0
    %1577 = vmatprep.mubr.f32.mxu0 0.0
    %1578 = vmatmul.mubr.f32.gmra.mrb[0].mxu0 %v1476
    %v1579 = vpop.f32.mrb[0].mxu0
    %v1580 = vadd.f32 0.0, %v1579
    %v1581 = vpop.f32.mrb[0].mxu0
    %1582 = vdwg.mxu0
    %1583 = vrot.lane.b32.xlu0 %v321, 104
    %v1584 = vpop.permute.xlu0 %1583
    %1585 = vrot.lane.b32.xlu0 %v326, 104
    %v1586 = vpop.permute.xlu0 %1585
    %1587 = vrot.lane.b32.xlu0 %v331, 104
    %v1588 = vpop.permute.xlu0 %1587
    %1589 = vrot.lane.b32.xlu0 %v336, 104
    %v1590 = vpop.permute.xlu0 %1589
    %1591 = vrot.lane.b32.xlu0 %v341, 104
    %v1592 = vpop.permute.xlu0 %1591
    %1593 = vrot.lane.b32.xlu0 %v346, 104
    %v1594 = vpop.permute.xlu0 %1593
    %1595 = vrot.lane.b32.xlu0 %v351, 104
    %v1596 = vpop.permute.xlu0 %1595
    %1597 = vrot.lane.b32.xlu0 %v356, 104
    %v1598 = vpop.permute.xlu0 %1597
    %1599 = vrot.lane.b32.xlu0 %v321, 72
    %v1600 = vpop.permute.xlu0 %1599
    %1601 = vrot.lane.b32.xlu0 %v326, 72
    %v1602 = vpop.permute.xlu0 %1601
    %1603 = vrot.lane.b32.xlu0 %v331, 72
    %v1604 = vpop.permute.xlu0 %1603
    %1605 = vrot.lane.b32.xlu0 %v336, 72
    %v1606 = vpop.permute.xlu0 %1605
    %1607 = vrot.lane.b32.xlu0 %v341, 72
    %v1608 = vpop.permute.xlu0 %1607
    %1609 = vrot.lane.b32.xlu0 %v346, 72
    %v1610 = vpop.permute.xlu0 %1609
    %1611 = vrot.lane.b32.xlu0 %v351, 72
    %v1612 = vpop.permute.xlu0 %1611
    %1613 = vrot.lane.b32.xlu0 %v356, 72
    %v1614 = vpop.permute.xlu0 %1613
    %v1615 = vsel %vm383, %v1584, 0
    %v1617 = vsel %vm383, %v1586, 0
    %v1619 = vsel %vm383, %v1588, 0
    %v1621 = vsel %vm383, %v1590, 0
    %v1623 = vsel %vm383, %v1592, 0
    %v1625 = vsel %vm383, %v1594, 0
    %v1627 = vsel %vm383, %v1596, 0
    %v1629 = vsel %vm383, %v1598, 0
    %v1631 = vsel %vm383, %v1600, 0
    %v1633 = vsel %vm383, %v1602, 0
    %v1635 = vsel %vm383, %v1604, 0
    %v1637 = vsel %vm383, %v1606, 0
    %v1639 = vsel %vm383, %v1608, 0
    %v1641 = vsel %vm383, %v1610, 0
    %v1643 = vsel %vm383, %v1612, 0
    %v1645 = vsel %vm383, %v1614, 0
    %1647 = vmatprep.subr.mxu0 0.0
    %1648 = vmatpush1.xpose.msra.mxu0 %v1631
    %1649 = vmatprep.subr.mxu0 0.0
    %1650 = vmatpush1.xpose.msra.mxu0 %v1633
    %1651 = vmatprep.subr.mxu0 0.0
    %1652 = vmatpush1.xpose.msra.mxu0 %v1635
    %1653 = vmatprep.subr.mxu0 0.0
    %1654 = vmatpush1.xpose.msra.mxu0 %v1637
    %1655 = vmatprep.subr.mxu0 0.0
    %1656 = vmatpush1.xpose.msra.mxu0 %v1639
    %1657 = vmatprep.subr.mxu0 0.0
    %1658 = vmatpush1.xpose.msra.mxu0 %v1641
    %1659 = vmatprep.subr.mxu0 0.0
    %1660 = vmatpush1.xpose.msra.mxu0 %v1643
    %1661 = vmatprep.subr.mxu0 0.0
    %1662 = vmatpush1.xpose.msra.mxu0 %v1645
    %1663 = vmatprep.subr.mxu0 0.0
    %1664 = vmatpush1.xpose.msra.mxu0 0.0
    %1665 = vmatprep.subr.mxu0 0.0
    %1666 = vmatpush1.xpose.msra.mxu0 0.0
    %1667 = vmatprep.subr.mxu0 0.0
    %1668 = vmatpush1.xpose.msra.mxu0 0.0
    %1669 = vmatprep.subr.mxu0 0.0
    %1670 = vmatpush1.xpose.msra.mxu0 0.0
    %1671 = vmatprep.subr.mxu0 0.0
    %1672 = vmatpush1.xpose.msra.mxu0 0.0
    %1673 = vmatprep.subr.mxu0 0.0
    %1674 = vmatpush1.xpose.msra.mxu0 0.0
    %1675 = vmatprep.subr.mxu0 0.0
    %1676 = vmatpush1.xpose.msra.mxu0 0.0
    %1677 = vmatprep.subr.mxu0 0.0
    %1678 = vmatpush1.xpose.msra.mxu0 0.0
    %1679 = vmatprep.subr.mxu0 0.0
    %1680 = vmatpush1.xpose.msra.mxu0 0.0
    %1681 = vmatprep.subr.mxu0 0.0
    %1682 = vmatpush1.xpose.msra.mxu0 0.0
    %1683 = vmatprep.subr.mxu0 0.0
    %1684 = vmatpush1.xpose.msra.mxu0 0.0
    %1685 = vmatprep.subr.mxu0 0.0
    %1686 = vmatpush1.xpose.msra.mxu0 0.0
    %1687 = vmatprep.subr.mxu0 0.0
    %1688 = vmatpush1.xpose.msra.mxu0 0.0
    %1689 = vmatprep.subr.mxu0 0.0
    %1690 = vmatpush1.xpose.msra.mxu0 0.0
    %1691 = vmatprep.subr.mxu0 0.0
    %1692 = vmatpush1.xpose.msra.mxu0 0.0
    %1693 = vmatprep.subr.mxu0 0.0
    %1694 = vmatpush1.xpose.msra.mxu0 0.0
    %1695 = vmatprep.subr.mxu0 0.0
    %1696 = vmatpush1.xpose.msra.mxu0 0.0
    %1697 = vmatprep.subr.mxu0 0.0
    %1698 = vmatpush1.xpose.msra.mxu0 0.0
    %1699 = vmatprep.subr.mxu0 0.0
    %1700 = vmatpush1.xpose.msra.mxu0 0.0
    %1701 = vmatprep.subr.mxu0 0.0
    %1702 = vmatpush1.xpose.msra.mxu0 0.0
    %1703 = vmatprep.subr.mxu0 0.0
    %1704 = vmatpush1.xpose.msra.mxu0 0.0
    %1705 = vmatprep.subr.mxu0 0.0
    %1706 = vmatpush1.xpose.msra.mxu0 0.0
    %1707 = vmatprep.subr.mxu0 0.0
    %1708 = vmatpush1.xpose.msra.mxu0 0.0
    %1709 = vmatprep.subr.mxu0 0.0
    %1710 = vmatpush1.xpose.msra.mxu0 0.0
    %1711 = vmatprep.mubr.f32.mxu0 0.0
    %1712 = vmatmul.mubr.f32.gmra.mrb[0].mxu0 %v1615
    %v1713 = vpop.f32.mrb[0].mxu0
    %v1714 = vadd.f32 %v64, %v1713
    %v1715 = vpop.f32.mrb[0].mxu0
    %1716 = vmatprep.mubr.f32.mxu0 0.0
    %1717 = vmatmul.mubr.f32.gmra.mrb[0].mxu0 %v1617
    %v1718 = vpop.f32.mrb[0].mxu0
    %v1719 = vadd.f32 %v65, %v1718
    %v1720 = vpop.f32.mrb[0].mxu0
    %1721 = vmatprep.mubr.f32.mxu0 0.0
    %1722 = vmatmul.mubr.f32.gmra.mrb[0].mxu0 %v1619
    %v1723 = vpop.f32.mrb[0].mxu0
    %v1724 = vadd.f32 %v66, %v1723
    %v1725 = vpop.f32.mrb[0].mxu0
    %1726 = vmatprep.mubr.f32.mxu0 0.0
    %1727 = vmatmul.mubr.f32.gmra.mrb[0].mxu0 %v1621
    %v1728 = vpop.f32.mrb[0].mxu0
    %v1729 = vadd.f32 %v67, %v1728
    %v1730 = vpop.f32.mrb[0].mxu0
    %1731 = vmatprep.mubr.f32.mxu0 0.0
    %1732 = vmatmul.mubr.f32.gmra.mrb[0].mxu0 %v1623
    %v1733 = vpop.f32.mrb[0].mxu0
    %v1734 = vadd.f32 %v68, %v1733
    %v1735 = vpop.f32.mrb[0].mxu0
    %1736 = vmatprep.mubr.f32.mxu0 0.0
    %1737 = vmatmul.mubr.f32.gmra.mrb[0].mxu0 %v1625
    %v1738 = vpop.f32.mrb[0].mxu0
    %v1739 = vadd.f32 %v69, %v1738
    %v1740 = vpop.f32.mrb[0].mxu0
    %1741 = vmatprep.mubr.f32.mxu0 0.0
    %1742 = vmatmul.mubr.f32.gmra.mrb[0].mxu0 %v1627
    %v1743 = vpop.f32.mrb[0].mxu0
    %v1744 = vadd.f32 %v70, %v1743
    %v1745 = vpop.f32.mrb[0].mxu0
    %1746 = vmatprep.mubr.f32.mxu0 0.0
    %1747 = vmatmul.mubr.f32.gmra.mrb[0].mxu0 %v1629
    %v1748 = vpop.f32.mrb[0].mxu0
    %v1749 = vadd.f32 %v71, %v1748
    %v1750 = vpop.f32.mrb[0].mxu0
    %1751 = vdwg.mxu0
    %v1752 = vsel %vm521, %v1714, -inf
    %1753 = vmax.xlane.f32.xlu0 %v1752
    %v1754 = vpop.xlane.xlu0 %1753
    %v1755 = vsel %vm521, %v1719, -inf
    %1756 = vmax.xlane.f32.xlu0 %v1755
    %v1757 = vpop.xlane.xlu0 %1756
    %v1758 = vsel %vm521, %v1724, -inf
    %1759 = vmax.xlane.f32.xlu0 %v1758
    %v1760 = vpop.xlane.xlu0 %1759
    %v1761 = vsel %vm521, %v1729, -inf
    %1762 = vmax.xlane.f32.xlu0 %v1761
    %v1763 = vpop.xlane.xlu0 %1762
    %v1764 = vsel %vm521, %v1734, -inf
    %1765 = vmax.xlane.f32.xlu0 %v1764
    %v1766 = vpop.xlane.xlu0 %1765
    %v1767 = vsel %vm521, %v1739, -inf
    %1768 = vmax.xlane.f32.xlu0 %v1767
    %v1769 = vpop.xlane.xlu0 %1768
    %v1770 = vsel %vm521, %v1744, -inf
    %1771 = vmax.xlane.f32.xlu0 %v1770
    %v1772 = vpop.xlane.xlu0 %1771
    %v1773 = vsel %vm521, %v1749, -inf
    %1774 = vmax.xlane.f32.xlu0 %v1773
    %v1775 = vpop.xlane.xlu0 %1774
    %v1776 = vsub.f32 %v1714, %v1754
    %v1777 = vsub.f32 %v1719, %v1757
    %v1778 = vsub.f32 %v1724, %v1760
    %v1779 = vsub.f32 %v1729, %v1763
    %v1780 = vsub.f32 %v1734, %v1766
    %v1781 = vsub.f32 %v1739, %v1769
    %v1782 = vsub.f32 %v1744, %v1772
    %v1783 = vsub.f32 %v1749, %v1775
    %v1784 = vmul.f32 %v1776, 1.442695
    %v1785 = vpow.pop %v1784
    %v1786 = vmul.f32 %v1777, 1.442695
    %v1787 = vpow.pop %v1786
    %v1788 = vmul.f32 %v1778, 1.442695
    %v1789 = vpow.pop %v1788
    %v1790 = vmul.f32 %v1779, 1.442695
    %v1791 = vpow.pop %v1790
    %v1792 = vmul.f32 %v1780, 1.442695
    %v1793 = vpow.pop %v1792
    %v1794 = vmul.f32 %v1781, 1.442695
    %v1795 = vpow.pop %v1794
    %v1796 = vmul.f32 %v1782, 1.442695
    %v1797 = vpow.pop %v1796
    %v1798 = vmul.f32 %v1783, 1.442695
    %v1799 = vpow.pop %v1798
    %v1800 = vsel %vm521, %v1785, 0.0
    %1801 = vadd.xlane.f32.xlu0 %v1800
    %v1802 = vpop.xlane.xlu0 %1801
    %v1803 = vsel %vm521, %v1787, 0.0
    %1804 = vadd.xlane.f32.xlu0 %v1803
    %v1805 = vpop.xlane.xlu0 %1804
    %v1806 = vsel %vm521, %v1789, 0.0
    %1807 = vadd.xlane.f32.xlu0 %v1806
    %v1808 = vpop.xlane.xlu0 %1807
    %v1809 = vsel %vm521, %v1791, 0.0
    %1810 = vadd.xlane.f32.xlu0 %v1809
    %v1811 = vpop.xlane.xlu0 %1810
    %v1812 = vsel %vm521, %v1793, 0.0
    %1813 = vadd.xlane.f32.xlu0 %v1812
    %v1814 = vpop.xlane.xlu0 %1813
    %v1815 = vsel %vm521, %v1795, 0.0
    %1816 = vadd.xlane.f32.xlu0 %v1815
    %v1817 = vpop.xlane.xlu0 %1816
    %v1818 = vsel %vm521, %v1797, 0.0
    %1819 = vadd.xlane.f32.xlu0 %v1818
    %v1820 = vpop.xlane.xlu0 %1819
    %v1821 = vsel %vm521, %v1799, 0.0
    %1822 = vadd.xlane.f32.xlu0 %v1821
    %v1823 = vpop.xlane.xlu0 %1822
    %v1824 = vrcp.pop %v1802
    %v1825 = vrcp.pop %v1805
    %v1826 = vrcp.pop %v1808
    %v1827 = vrcp.pop %v1811
    %v1828 = vrcp.pop %v1814
    %v1829 = vrcp.pop %v1817
    %v1830 = vrcp.pop %v1820
    %v1831 = vrcp.pop %v1823
    %v1832 = vmul.f32 %v1785, %v1824
    %v1833 = vmul.f32 %v1787, %v1825
    %v1834 = vmul.f32 %v1789, %v1826
    %v1835 = vmul.f32 %v1791, %v1827
    %v1836 = vmul.f32 %v1793, %v1828
    %v1837 = vmul.f32 %v1795, %v1829
    %v1838 = vmul.f32 %v1797, %v1830
    %v1839 = vmul.f32 %v1799, %v1831
    %1840 = vrot.lane.b32.xlu0 %v321, 40
    %v1841 = vpop.permute.xlu0 %1840
    %1842 = vrot.lane.b32.xlu0 %v326, 40
    %v1843 = vpop.permute.xlu0 %1842
    %1844 = vrot.lane.b32.xlu0 %v331, 40
    %v1845 = vpop.permute.xlu0 %1844
    %1846 = vrot.lane.b32.xlu0 %v336, 40
    %v1847 = vpop.permute.xlu0 %1846
    %1848 = vrot.lane.b32.xlu0 %v341, 40
    %v1849 = vpop.permute.xlu0 %1848
    %1850 = vrot.lane.b32.xlu0 %v346, 40
    %v1851 = vpop.permute.xlu0 %1850
    %1852 = vrot.lane.b32.xlu0 %v351, 40
    %v1853 = vpop.permute.xlu0 %1852
    %1854 = vrot.lane.b32.xlu0 %v356, 40
    %v1855 = vpop.permute.xlu0 %1854
    %v1865 = vsel %vm521, %v1832, 0
    %v1868 = vsel %vm521, %v1833, 0
    %v1871 = vsel %vm521, %v1834, 0
    %v1874 = vsel %vm521, %v1835, 0
    %v1877 = vsel %vm521, %v1836, 0
    %v1880 = vsel %vm521, %v1837, 0
    %v1883 = vsel %vm521, %v1838, 0
    %v1886 = vsel %vm521, %v1839, 0
    %1888 = vmatprep.subr.mxu0 0.0
    %1889 = vmatpush1.msra.mxu0 %v1841
    %1890 = vmatprep.subr.mxu0 0.0
    %1891 = vmatpush1.msra.mxu0 %v1843
    %1892 = vmatprep.subr.mxu0 0.0
    %1893 = vmatpush1.msra.mxu0 %v1845
    %1894 = vmatprep.subr.mxu0 0.0
    %1895 = vmatpush1.msra.mxu0 %v1847
    %1896 = vmatprep.subr.mxu0 0.0
    %1897 = vmatpush1.msra.mxu0 %v1849
    %1898 = vmatprep.subr.mxu0 0.0
    %1899 = vmatpush1.msra.mxu0 %v1851
    %1900 = vmatprep.subr.mxu0 0.0
    %1901 = vmatpush1.msra.mxu0 %v1853
    %1902 = vmatprep.subr.mxu0 0.0
    %1903 = vmatpush1.msra.mxu0 %v1855
    %1904 = vmatprep.subr.mxu0 0.0
    %1905 = vmatpush1.msra.mxu0 0.0
    %1906 = vmatprep.subr.mxu0 0.0
    %1907 = vmatpush1.msra.mxu0 0.0
    %1908 = vmatprep.subr.mxu0 0.0
    %1909 = vmatpush1.msra.mxu0 0.0
    %1910 = vmatprep.subr.mxu0 0.0
    %1911 = vmatpush1.msra.mxu0 0.0
    %1912 = vmatprep.subr.mxu0 0.0
    %1913 = vmatpush1.msra.mxu0 0.0
    %1914 = vmatprep.subr.mxu0 0.0
    %1915 = vmatpush1.msra.mxu0 0.0
    %1916 = vmatprep.subr.mxu0 0.0
    %1917 = vmatpush1.msra.mxu0 0.0
    %1918 = vmatprep.subr.mxu0 0.0
    %1919 = vmatpush1.msra.mxu0 0.0
    %1920 = vmatprep.subr.mxu0 0.0
    %1921 = vmatpush1.msra.mxu0 0.0
    %1922 = vmatprep.subr.mxu0 0.0
    %1923 = vmatpush1.msra.mxu0 0.0
    %1924 = vmatprep.subr.mxu0 0.0
    %1925 = vmatpush1.msra.mxu0 0.0
    %1926 = vmatprep.subr.mxu0 0.0
    %1927 = vmatpush1.msra.mxu0 0.0
    %1928 = vmatprep.subr.mxu0 0.0
    %1929 = vmatpush1.msra.mxu0 0.0
    %1930 = vmatprep.subr.mxu0 0.0
    %1931 = vmatpush1.msra.mxu0 0.0
    %1932 = vmatprep.subr.mxu0 0.0
    %1933 = vmatpush1.msra.mxu0 0.0
    %1934 = vmatprep.subr.mxu0 0.0
    %1935 = vmatpush1.msra.mxu0 0.0
    %1936 = vmatprep.subr.mxu0 0.0
    %1937 = vmatpush1.msra.mxu0 0.0
    %1938 = vmatprep.subr.mxu0 0.0
    %1939 = vmatpush1.msra.mxu0 0.0
    %1940 = vmatprep.subr.mxu0 0.0
    %1941 = vmatpush1.msra.mxu0 0.0
    %1942 = vmatprep.subr.mxu0 0.0
    %1943 = vmatpush1.msra.mxu0 0.0
    %1944 = vmatprep.subr.mxu0 0.0
    %1945 = vmatpush1.msra.mxu0 0.0
    %1946 = vmatprep.subr.mxu0 0.0
    %1947 = vmatpush1.msra.mxu0 0.0
    %1948 = vmatprep.subr.mxu0 0.0
    %1949 = vmatpush1.msra.mxu0 0.0
    %1950 = vmatprep.subr.mxu0 0.0
    %1951 = vmatpush1.msra.mxu0 0.0
    %1952 = vmatprep.mubr.f32.mxu0 0.0
    %1953 = vmatmul.mubr.f32.gmra.mrb[0].mxu0 %v1865
    %v1954 = vpop.f32.mrb[0].mxu0
    %v1955 = vadd.f32 0.0, %v1954
    %v1956 = vpop.f32.mrb[0].mxu0
    %1957 = vmatprep.mubr.f32.mxu0 0.0
    %1958 = vmatmul.mubr.f32.gmra.mrb[0].mxu0 %v1868
    %v1959 = vpop.f32.mrb[0].mxu0
    %v1960 = vadd.f32 0.0, %v1959
    %v1961 = vpop.f32.mrb[0].mxu0
    %1962 = vmatprep.mubr.f32.mxu0 0.0
    %1963 = vmatmul.mubr.f32.gmra.mrb[0].mxu0 %v1871
    %v1964 = vpop.f32.mrb[0].mxu0
    %v1965 = vadd.f32 0.0, %v1964
    %v1966 = vpop.f32.mrb[0].mxu0
    %1967 = vmatprep.mubr.f32.mxu0 0.0
    %1968 = vmatmul.mubr.f32.gmra.mrb[0].mxu0 %v1874
    %v1969 = vpop.f32.mrb[0].mxu0
    %v1970 = vadd.f32 0.0, %v1969
    %v1971 = vpop.f32.mrb[0].mxu0
    %1972 = vmatprep.mubr.f32.mxu0 0.0
    %1973 = vmatmul.mubr.f32.gmra.mrb[0].mxu0 %v1877
    %v1974 = vpop.f32.mrb[0].mxu0
    %v1975 = vadd.f32 0.0, %v1974
    %v1976 = vpop.f32.mrb[0].mxu0
    %1977 = vmatprep.mubr.f32.mxu0 0.0
    %1978 = vmatmul.mubr.f32.gmra.mrb[0].mxu0 %v1880
    %v1979 = vpop.f32.mrb[0].mxu0
    %v1980 = vadd.f32 0.0, %v1979
    %v1981 = vpop.f32.mrb[0].mxu0
    %1982 = vmatprep.mubr.f32.mxu0 0.0
    %1983 = vmatmul.mubr.f32.gmra.mrb[0].mxu0 %v1883
    %v1984 = vpop.f32.mrb[0].mxu0
    %v1985 = vadd.f32 0.0, %v1984
    %v1986 = vpop.f32.mrb[0].mxu0
    %1987 = vmatprep.mubr.f32.mxu0 0.0
    %1988 = vmatmul.mubr.f32.gmra.mrb[0].mxu0 %v1886
    %v1989 = vpop.f32.mrb[0].mxu0
    %v1990 = vadd.f32 0.0, %v1989
    %v1991 = vpop.f32.mrb[0].mxu0
    %1992 = vdwg.mxu0
    %2001 = vrot.lane.b32.xlu0 %v1135, 8
    %v2002 = vpop.permute.xlu0 %2001
    %2003 = vrot.lane.b32.xlu0 %v1140, 8
    %v2004 = vpop.permute.xlu0 %2003
    %2005 = vrot.lane.b32.xlu0 %v1145, 8
    %v2006 = vpop.permute.xlu0 %2005
    %2007 = vrot.lane.b32.xlu0 %v1150, 8
    %v2008 = vpop.permute.xlu0 %2007
    %2009 = vrot.lane.b32.xlu0 %v1155, 8
    %v2010 = vpop.permute.xlu0 %2009
    %2011 = vrot.lane.b32.xlu0 %v1160, 8
    %v2012 = vpop.permute.xlu0 %2011
    %2013 = vrot.lane.b32.xlu0 %v1165, 8
    %v2014 = vpop.permute.xlu0 %2013
    %2015 = vrot.lane.b32.xlu0 %v1170, 8
    %v2016 = vpop.permute.xlu0 %2015
    %2033 = vrot.lane.b32.xlu0 %v1545, 16
    %v2034 = vpop.permute.xlu0 %2033
    %2035 = vrot.lane.b32.xlu0 %v1550, 16
    %v2036 = vpop.permute.xlu0 %2035
    %2037 = vrot.lane.b32.xlu0 %v1555, 16
    %v2038 = vpop.permute.xlu0 %2037
    %2039 = vrot.lane.b32.xlu0 %v1560, 16
    %v2040 = vpop.permute.xlu0 %2039
    %2041 = vrot.lane.b32.xlu0 %v1565, 16
    %v2042 = vpop.permute.xlu0 %2041
    %2043 = vrot.lane.b32.xlu0 %v1570, 16
    %v2044 = vpop.permute.xlu0 %2043
    %2045 = vrot.lane.b32.xlu0 %v1575, 16
    %v2046 = vpop.permute.xlu0 %2045
    %2047 = vrot.lane.b32.xlu0 %v1580, 16
    %v2048 = vpop.permute.xlu0 %2047
    %2065 = vrot.lane.b32.xlu0 %v1955, 24
    %v2066 = vpop.permute.xlu0 %2065
    %2067 = vrot.lane.b32.xlu0 %v1960, 24
    %v2068 = vpop.permute.xlu0 %2067
    %2069 = vrot.lane.b32.xlu0 %v1965, 24
    %v2070 = vpop.permute.xlu0 %2069
    %2071 = vrot.lane.b32.xlu0 %v1970, 24
    %v2072 = vpop.permute.xlu0 %2071
    %2073 = vrot.lane.b32.xlu0 %v1975, 24
    %v2074 = vpop.permute.xlu0 %2073
    %2075 = vrot.lane.b32.xlu0 %v1980, 24
    %v2076 = vpop.permute.xlu0 %2075
    %2077 = vrot.lane.b32.xlu0 %v1985, 24
    %v2078 = vpop.permute.xlu0 %2077
    %2079 = vrot.lane.b32.xlu0 %v1990, 24
    %v2080 = vpop.permute.xlu0 %2079
    %v2089 = vsel %vm383, %v725, %v2002
    %v2090 = vsel %vm383, %v730, %v2004
    %v2091 = vsel %vm383, %v735, %v2006
    %v2092 = vsel %vm383, %v740, %v2008
    %v2093 = vsel %vm383, %v745, %v2010
    %v2094 = vsel %vm383, %v750, %v2012
    %v2095 = vsel %vm383, %v755, %v2014
    %v2096 = vsel %vm383, %v760, %v2016
    %vm2097 = vcmask 130048
    %v2098 = vsel %vm2097, %v2089, %v2034
    %v2099 = vsel %vm2097, %v2090, %v2036
    %v2100 = vsel %vm2097, %v2091, %v2038
    %v2101 = vsel %vm2097, %v2092, %v2040
    %v2102 = vsel %vm2097, %v2093, %v2042
    %v2103 = vsel %vm2097, %v2094, %v2044
    %v2104 = vsel %vm2097, %v2095, %v2046
    %v2105 = vsel %vm2097, %v2096, %v2048
    %vm2106 = vcmask 195584
    %v2107 = vsel %vm2106, %v2098, %v2066
    %v2108 = vsel %vm2106, %v2099, %v2068
    %v2109 = vsel %vm2106, %v2100, %v2070
    %v2110 = vsel %vm2106, %v2101, %v2072
    %v2111 = vsel %vm2106, %v2102, %v2074
    %v2112 = vsel %vm2106, %v2103, %v2076
    %v2113 = vsel %vm2106, %v2104, %v2078
    %v2114 = vsel %vm2106, %v2105, %v2080
    %v2115 = vlaneseq
    %v2116 = vshrl.u32 %v2115, 7
    %v2117 = vsub.s32 0, %v2116
    %v2118 = vrot.slane %v93, %v2117
    %2123 = vrot.lane.b32.xlu0 %v72, 32
    %v2124 = vpop.permute.xlu0 %2123
    %2125 = vrot.lane.b32.xlu0 %v73, 32
    %v2126 = vpop.permute.xlu0 %2125
    %2127 = vrot.lane.b32.xlu0 %v74, 32
    %v2128 = vpop.permute.xlu0 %2127
    %2129 = vrot.lane.b32.xlu0 %v75, 32
    %v2130 = vpop.permute.xlu0 %2129
    %v2136 = vsel %vm96, %v2107, 0
    %v2139 = vsel %vm96, %v2108, 0
    %v2142 = vsel %vm96, %v2109, 0
    %v2145 = vsel %vm96, %v2110, 0
    %v2148 = vsel %vm96, %v2111, 0
    %v2151 = vsel %vm96, %v2112, 0
    %v2154 = vsel %vm96, %v2113, 0
    %v2157 = vsel %vm96, %v2114, 0
    %2159 = vmatprep.subr.mxu0 0.0
    %2160 = vmatpush1.msra.mxu0 %v2124
    %2161 = vmatprep.subr.mxu0 0.0
    %2162 = vmatpush1.msra.mxu0 %v2126
    %2163 = vmatprep.subr.mxu0 0.0
    %2164 = vmatpush1.msra.mxu0 %v2128
    %2165 = vmatprep.subr.mxu0 0.0
    %2166 = vmatpush1.msra.mxu0 %v2130
    %2167 = vmatprep.subr.mxu0 0.0
    %2168 = vmatpush1.msra.mxu0 0.0
    %2169 = vmatprep.subr.mxu0 0.0
    %2170 = vmatpush1.msra.mxu0 0.0
    %2171 = vmatprep.subr.mxu0 0.0
    %2172 = vmatpush1.msra.mxu0 0.0
    %2173 = vmatprep.subr.mxu0 0.0
    %2174 = vmatpush1.msra.mxu0 0.0
    %2175 = vmatprep.subr.mxu0 0.0
    %2176 = vmatpush1.msra.mxu0 0.0
    %2177 = vmatprep.subr.mxu0 0.0
    %2178 = vmatpush1.msra.mxu0 0.0
    %2179 = vmatprep.subr.mxu0 0.0
    %2180 = vmatpush1.msra.mxu0 0.0
    %2181 = vmatprep.subr.mxu0 0.0
    %2182 = vmatpush1.msra.mxu0 0.0
    %2183 = vmatprep.subr.mxu0 0.0
    %2184 = vmatpush1.msra.mxu0 0.0
    %2185 = vmatprep.subr.mxu0 0.0
    %2186 = vmatpush1.msra.mxu0 0.0
    %2187 = vmatprep.subr.mxu0 0.0
    %2188 = vmatpush1.msra.mxu0 0.0
    %2189 = vmatprep.subr.mxu0 0.0
    %2190 = vmatpush1.msra.mxu0 0.0
    %2191 = vmatprep.subr.mxu0 0.0
    %2192 = vmatpush1.msra.mxu0 0.0
    %2193 = vmatprep.subr.mxu0 0.0
    %2194 = vmatpush1.msra.mxu0 0.0
    %2195 = vmatprep.subr.mxu0 0.0
    %2196 = vmatpush1.msra.mxu0 0.0
    %2197 = vmatprep.subr.mxu0 0.0
    %2198 = vmatpush1.msra.mxu0 0.0
    %2199 = vmatprep.subr.mxu0 0.0
    %2200 = vmatpush1.msra.mxu0 0.0
    %2201 = vmatprep.subr.mxu0 0.0
    %2202 = vmatpush1.msra.mxu0 0.0
    %2203 = vmatprep.subr.mxu0 0.0
    %2204 = vmatpush1.msra.mxu0 0.0
    %2205 = vmatprep.subr.mxu0 0.0
    %2206 = vmatpush1.msra.mxu0 0.0
    %2207 = vmatprep.subr.mxu0 0.0
    %2208 = vmatpush1.msra.mxu0 0.0
    %2209 = vmatprep.subr.mxu0 0.0
    %2210 = vmatpush1.msra.mxu0 0.0
    %2211 = vmatprep.subr.mxu0 0.0
    %2212 = vmatpush1.msra.mxu0 0.0
    %2213 = vmatprep.subr.mxu0 0.0
    %2214 = vmatpush1.msra.mxu0 0.0
    %2215 = vmatprep.subr.mxu0 0.0
    %2216 = vmatpush1.msra.mxu0 0.0
    %2217 = vmatprep.subr.mxu0 0.0
    %2218 = vmatpush1.msra.mxu0 0.0
    %2219 = vmatprep.subr.mxu0 0.0
    %2220 = vmatpush1.msra.mxu0 0.0
    %2221 = vmatprep.subr.mxu0 0.0
    %2222 = vmatpush1.msra.mxu0 0.0
    %2223 = vmatprep.mubr.f32.mxu0 0.0
    %2224 = vmatmul.mubr.f32.gmra.mrb[0].mxu0 %v2136
    %v2225 = vpop.f32.mrb[0].mxu0
    %v2226 = vadd.f32 %v2118, %v2225
    %v2227 = vpop.f32.mrb[0].mxu0
    %2228 = vmatprep.mubr.f32.mxu0 0.0
    %2229 = vmatmul.mubr.f32.gmra.mrb[0].mxu0 %v2139
    %v2230 = vpop.f32.mrb[0].mxu0
    %v2231 = vadd.f32 %v2118, %v2230
    %v2232 = vpop.f32.mrb[0].mxu0
    %2233 = vmatprep.mubr.f32.mxu0 0.0
    %2234 = vmatmul.mubr.f32.gmra.mrb[0].mxu0 %v2142
    %v2235 = vpop.f32.mrb[0].mxu0
    %v2236 = vadd.f32 %v2118, %v2235
    %v2237 = vpop.f32.mrb[0].mxu0
    %2238 = vmatprep.mubr.f32.mxu0 0.0
    %2239 = vmatmul.mubr.f32.gmra.mrb[0].mxu0 %v2145
    %v2240 = vpop.f32.mrb[0].mxu0
    %v2241 = vadd.f32 %v2118, %v2240
    %v2242 = vpop.f32.mrb[0].mxu0
    %2243 = vmatprep.mubr.f32.mxu0 0.0
    %2244 = vmatmul.mubr.f32.gmra.mrb[0].mxu0 %v2148
    %v2245 = vpop.f32.mrb[0].mxu0
    %v2246 = vadd.f32 %v2118, %v2245
    %v2247 = vpop.f32.mrb[0].mxu0
    %2248 = vmatprep.mubr.f32.mxu0 0.0
    %2249 = vmatmul.mubr.f32.gmra.mrb[0].mxu0 %v2151
    %v2250 = vpop.f32.mrb[0].mxu0
    %v2251 = vadd.f32 %v2118, %v2250
    %v2252 = vpop.f32.mrb[0].mxu0
    %2253 = vmatprep.mubr.f32.mxu0 0.0
    %2254 = vmatmul.mubr.f32.gmra.mrb[0].mxu0 %v2154
    %v2255 = vpop.f32.mrb[0].mxu0
    %v2256 = vadd.f32 %v2118, %v2255
    %v2257 = vpop.f32.mrb[0].mxu0
    %2258 = vmatprep.mubr.f32.mxu0 0.0
    %2259 = vmatmul.mubr.f32.gmra.mrb[0].mxu0 %v2157
    %v2260 = vpop.f32.mrb[0].mxu0
    %v2261 = vadd.f32 %v2118, %v2260
    %v2262 = vpop.f32.mrb[0].mxu0
    %2263 = vdwg.mxu0
    %v2264 = vadd.f32 %v56, %v2226
    %v2265 = vadd.f32 %v57, %v2231
    %v2266 = vadd.f32 %v58, %v2236
    %v2267 = vadd.f32 %v59, %v2241
    %v2268 = vadd.f32 %v60, %v2246
    %v2269 = vadd.f32 %v61, %v2251
    %v2270 = vadd.f32 %v62, %v2256
    %v2271 = vadd.f32 %v63, %v2261
    %v2272 = vsel %vm96, %v2264, 0.0
    %2273 = vadd.xlane.f32.xlu0 %v2272
    %v2274 = vpop.xlane.xlu0 %2273
    %v2275 = vsel %vm96, %v2265, 0.0
    %2276 = vadd.xlane.f32.xlu0 %v2275
    %v2277 = vpop.xlane.xlu0 %2276
    %v2278 = vsel %vm96, %v2266, 0.0
    %2279 = vadd.xlane.f32.xlu0 %v2278
    %v2280 = vpop.xlane.xlu0 %2279
    %v2281 = vsel %vm96, %v2267, 0.0
    %2282 = vadd.xlane.f32.xlu0 %v2281
    %v2283 = vpop.xlane.xlu0 %2282
    %v2284 = vsel %vm96, %v2268, 0.0
    %2285 = vadd.xlane.f32.xlu0 %v2284
    %v2286 = vpop.xlane.xlu0 %2285
    %v2287 = vsel %vm96, %v2269, 0.0
    %2288 = vadd.xlane.f32.xlu0 %v2287
    %v2289 = vpop.xlane.xlu0 %2288
    %v2290 = vsel %vm96, %v2270, 0.0
    %2291 = vadd.xlane.f32.xlu0 %v2290
    %v2292 = vpop.xlane.xlu0 %2291
    %v2293 = vsel %vm96, %v2271, 0.0
    %2294 = vadd.xlane.f32.xlu0 %v2293
    %v2295 = vpop.xlane.xlu0 %2294
    %v2296 = vmul.f32 %v2274, %v121
    %v2297 = vmul.f32 %v2277, %v121
    %v2298 = vmul.f32 %v2280, %v121
    %v2299 = vmul.f32 %v2283, %v121
    %v2300 = vmul.f32 %v2286, %v121
    %v2301 = vmul.f32 %v2289, %v121
    %v2302 = vmul.f32 %v2292, %v121
    %v2303 = vmul.f32 %v2295, %v121
    %v2304 = vsub.f32 %v2264, %v2296
    %v2305 = vsub.f32 %v2265, %v2297
    %v2306 = vsub.f32 %v2266, %v2298
    %v2307 = vsub.f32 %v2267, %v2299
    %v2308 = vsub.f32 %v2268, %v2300
    %v2309 = vsub.f32 %v2269, %v2301
    %v2310 = vsub.f32 %v2270, %v2302
    %v2311 = vsub.f32 %v2271, %v2303
    %v2312 = vmul.f32 %v2304, %v2304
    %v2313 = vmul.f32 %v2305, %v2305
    %v2314 = vmul.f32 %v2306, %v2306
    %v2315 = vmul.f32 %v2307, %v2307
    %v2316 = vmul.f32 %v2308, %v2308
    %v2317 = vmul.f32 %v2309, %v2309
    %v2318 = vmul.f32 %v2310, %v2310
    %v2319 = vmul.f32 %v2311, %v2311
    %v2320 = vsel %vm96, %v2312, 0.0
    %2321 = vadd.xlane.f32.xlu0 %v2320
    %v2322 = vpop.xlane.xlu0 %2321
    %v2323 = vsel %vm96, %v2313, 0.0
    %2324 = vadd.xlane.f32.xlu0 %v2323
    %v2325 = vpop.xlane.xlu0 %2324
    %v2326 = vsel %vm96, %v2314, 0.0
    %2327 = vadd.xlane.f32.xlu0 %v2326
    %v2328 = vpop.xlane.xlu0 %2327
    %v2329 = vsel %vm96, %v2315, 0.0
    %2330 = vadd.xlane.f32.xlu0 %v2329
    %v2331 = vpop.xlane.xlu0 %2330
    %v2332 = vsel %vm96, %v2316, 0.0
    %2333 = vadd.xlane.f32.xlu0 %v2332
    %v2334 = vpop.xlane.xlu0 %2333
    %v2335 = vsel %vm96, %v2317, 0.0
    %2336 = vadd.xlane.f32.xlu0 %v2335
    %v2337 = vpop.xlane.xlu0 %2336
    %v2338 = vsel %vm96, %v2318, 0.0
    %2339 = vadd.xlane.f32.xlu0 %v2338
    %v2340 = vpop.xlane.xlu0 %2339
    %v2341 = vsel %vm96, %v2319, 0.0
    %2342 = vadd.xlane.f32.xlu0 %v2341
    %v2343 = vpop.xlane.xlu0 %2342
    %v2344 = vmul.f32 %v2322, %v121
    %v2345 = vmul.f32 %v2325, %v121
    %v2346 = vmul.f32 %v2328, %v121
    %v2347 = vmul.f32 %v2331, %v121
    %v2348 = vmul.f32 %v2334, %v121
    %v2349 = vmul.f32 %v2337, %v121
    %v2350 = vmul.f32 %v2340, %v121
    %v2351 = vmul.f32 %v2343, %v121
    %v2352 = vadd.f32 %v2344, 1e-05
    %v2353 = vadd.f32 %v2345, 1e-05
    %v2354 = vadd.f32 %v2346, 1e-05
    %v2355 = vadd.f32 %v2347, 1e-05
    %v2356 = vadd.f32 %v2348, 1e-05
    %v2357 = vadd.f32 %v2349, 1e-05
    %v2358 = vadd.f32 %v2350, 1e-05
    %v2359 = vadd.f32 %v2351, 1e-05
    %v2360 = vrsqrt.pop %v2352
    %v2361 = vrsqrt.pop %v2353
    %v2362 = vrsqrt.pop %v2354
    %v2363 = vrsqrt.pop %v2355
    %v2364 = vrsqrt.pop %v2356
    %v2365 = vrsqrt.pop %v2357
    %v2366 = vrsqrt.pop %v2358
    %v2367 = vrsqrt.pop %v2359
    %v2368 = vmul.f32 %v2304, %v2360
    %v2369 = vmul.f32 %v2305, %v2361
    %v2370 = vmul.f32 %v2306, %v2362
    %v2371 = vmul.f32 %v2307, %v2363
    %v2372 = vmul.f32 %v2308, %v2364
    %v2373 = vmul.f32 %v2309, %v2365
    %v2374 = vmul.f32 %v2310, %v2366
    %v2375 = vmul.f32 %v2311, %v2367
    %v2376 = vlaneseq
    %v2377 = vshrl.u32 %v2376, 7
    %v2378 = vsub.s32 0, %v2377
    %v2379 = vrot.slane %v90, %v2378
    %v2380 = vmul.f32 %v2368, %v2379
    %v2381 = vmul.f32 %v2369, %v2379
    %v2382 = vmul.f32 %v2370, %v2379
    %v2383 = vmul.f32 %v2371, %v2379
    %v2384 = vmul.f32 %v2372, %v2379
    %v2385 = vmul.f32 %v2373, %v2379
    %v2386 = vmul.f32 %v2374, %v2379
    %v2387 = vmul.f32 %v2375, %v2379
    %v2388 = vlaneseq
    %v2389 = vshrl.u32 %v2388, 7
    %v2390 = vsub.s32 0, %v2389
    %v2391 = vrot.slane %v91, %v2390
    %v2392 = vadd.f32 %v2380, %v2391
    %v2393 = vadd.f32 %v2381, %v2391
    %v2394 = vadd.f32 %v2382, %v2391
    %v2395 = vadd.f32 %v2383, %v2391
    %v2396 = vadd.f32 %v2384, %v2391
    %v2397 = vadd.f32 %v2385, %v2391
    %v2398 = vadd.f32 %v2386, %v2391
    %v2399 = vadd.f32 %v2387, %v2391
    %v2400 = vlaneseq
    %v2401 = vshrl.u32 %v2400, 7
    %v2402 = vsub.s32 0, %v2401
    %v2403 = vrot.slane %v94, %v2402
    %v2405 = vsel %vm96, %v2392, 0
    %v2408 = vsel %vm96, %v2393, 0
    %v2411 = vsel %vm96, %v2394, 0
    %v2414 = vsel %vm96, %v2395, 0
    %v2417 = vsel %vm96, %v2396, 0
    %v2420 = vsel %vm96, %v2397, 0
    %v2423 = vsel %vm96, %v2398, 0
    %v2426 = vsel %vm96, %v2399, 0
    %2428 = vmatprep.subr.mxu0 0.0
    %2429 = vmatpush1.msra.mxu0 %v76
    %2430 = vmatprep.subr.mxu0 0.0
    %2431 = vmatpush1.msra.mxu0 %v77
    %2432 = vmatprep.subr.mxu0 0.0
    %2433 = vmatpush1.msra.mxu0 %v78
    %2434 = vmatprep.subr.mxu0 0.0
    %2435 = vmatpush1.msra.mxu0 %v79
    %2436 = vmatprep.subr.mxu0 0.0
    %2437 = vmatpush1.msra.mxu0 0.0
    %2438 = vmatprep.subr.mxu0 0.0
    %2439 = vmatpush1.msra.mxu0 0.0
    %2440 = vmatprep.subr.mxu0 0.0
    %2441 = vmatpush1.msra.mxu0 0.0
    %2442 = vmatprep.subr.mxu0 0.0
    %2443 = vmatpush1.msra.mxu0 0.0
    %2444 = vmatprep.subr.mxu0 0.0
    %2445 = vmatpush1.msra.mxu0 0.0
    %2446 = vmatprep.subr.mxu0 0.0
    %2447 = vmatpush1.msra.mxu0 0.0
    %2448 = vmatprep.subr.mxu0 0.0
    %2449 = vmatpush1.msra.mxu0 0.0
    %2450 = vmatprep.subr.mxu0 0.0
    %2451 = vmatpush1.msra.mxu0 0.0
    %2452 = vmatprep.subr.mxu0 0.0
    %2453 = vmatpush1.msra.mxu0 0.0
    %2454 = vmatprep.subr.mxu0 0.0
    %2455 = vmatpush1.msra.mxu0 0.0
    %2456 = vmatprep.subr.mxu0 0.0
    %2457 = vmatpush1.msra.mxu0 0.0
    %2458 = vmatprep.subr.mxu0 0.0
    %2459 = vmatpush1.msra.mxu0 0.0
    %2460 = vmatprep.subr.mxu0 0.0
    %2461 = vmatpush1.msra.mxu0 0.0
    %2462 = vmatprep.subr.mxu0 0.0
    %2463 = vmatpush1.msra.mxu0 0.0
    %2464 = vmatprep.subr.mxu0 0.0
    %2465 = vmatpush1.msra.mxu0 0.0
    %2466 = vmatprep.subr.mxu0 0.0
    %2467 = vmatpush1.msra.mxu0 0.0
    %2468 = vmatprep.subr.mxu0 0.0
    %2469 = vmatpush1.msra.mxu0 0.0
    %2470 = vmatprep.subr.mxu0 0.0
    %2471 = vmatpush1.msra.mxu0 0.0
    %2472 = vmatprep.subr.mxu0 0.0
    %2473 = vmatpush1.msra.mxu0 0.0
    %2474 = vmatprep.subr.mxu0 0.0
    %2475 = vmatpush1.msra.mxu0 0.0
    %2476 = vmatprep.subr.mxu0 0.0
    %2477 = vmatpush1.msra.mxu0 0.0
    %2478 = vmatprep.subr.mxu0 0.0
    %2479 = vmatpush1.msra.mxu0 0.0
    %2480 = vmatprep.subr.mxu0 0.0
    %2481 = vmatpush1.msra.mxu0 0.0
    %2482 = vmatprep.subr.mxu0 0.0
    %2483 = vmatpush1.msra.mxu0 0.0
    %2484 = vmatprep.subr.mxu0 0.0
    %2485 = vmatpush1.msra.mxu0 0.0
    %2486 = vmatprep.subr.mxu0 0.0
    %2487 = vmatpush1.msra.mxu0 0.0
    %2488 = vmatprep.subr.mxu0 0.0
    %2489 = vmatpush1.msra.mxu0 0.0
    %2490 = vmatprep.subr.mxu0 0.0
    %2491 = vmatpush1.msra.mxu0 0.0
    %2492 = vmatprep.mubr.f32.mxu0 0.0
    %2493 = vmatmul.mubr.f32.gmra.mrb[0].mxu0 %v2405
    %v2494 = vpop.f32.mrb[0].mxu0
    %v2495 = vadd.f32 %v2403, %v2494
    %v2496 = vpop.f32.mrb[0].mxu0
    %2497 = vmatprep.mubr.f32.mxu0 0.0
    %2498 = vmatmul.mubr.f32.gmra.mrb[0].mxu0 %v2408
    %v2499 = vpop.f32.mrb[0].mxu0
    %v2500 = vadd.f32 %v2403, %v2499
    %v2501 = vpop.f32.mrb[0].mxu0
    %2502 = vmatprep.mubr.f32.mxu0 0.0
    %2503 = vmatmul.mubr.f32.gmra.mrb[0].mxu0 %v2411
    %v2504 = vpop.f32.mrb[0].mxu0
    %v2505 = vadd.f32 %v2403, %v2504
    %v2506 = vpop.f32.mrb[0].mxu0
    %2507 = vmatprep.mubr.f32.mxu0 0.0
    %2508 = vmatmul.mubr.f32.gmra.mrb[0].mxu0 %v2414
    %v2509 = vpop.f32.mrb[0].mxu0
    %v2510 = vadd.f32 %v2403, %v2509
    %v2511 = vpop.f32.mrb[0].mxu0
    %2512 = vmatprep.mubr.f32.mxu0 0.0
    %2513 = vmatmul.mubr.f32.gmra.mrb[0].mxu0 %v2417
    %v2514 = vpop.f32.mrb[0].mxu0
    %v2515 = vadd.f32 %v2403, %v2514
    %v2516 = vpop.f32.mrb[0].mxu0
    %2517 = vmatprep.mubr.f32.mxu0 0.0
    %2518 = vmatmul.mubr.f32.gmra.mrb[0].mxu0 %v2420
    %v2519 = vpop.f32.mrb[0].mxu0
    %v2520 = vadd.f32 %v2403, %v2519
    %v2521 = vpop.f32.mrb[0].mxu0
    %2522 = vmatprep.mubr.f32.mxu0 0.0
    %2523 = vmatmul.mubr.f32.gmra.mrb[0].mxu0 %v2423
    %v2524 = vpop.f32.mrb[0].mxu0
    %v2525 = vadd.f32 %v2403, %v2524
    %v2526 = vpop.f32.mrb[0].mxu0
    %2527 = vmatprep.mubr.f32.mxu0 0.0
    %2528 = vmatmul.mubr.f32.gmra.mrb[0].mxu0 %v2426
    %v2529 = vpop.f32.mrb[0].mxu0
    %v2530 = vadd.f32 %v2403, %v2529
    %v2531 = vpop.f32.mrb[0].mxu0
    %2532 = vdwg.mxu0
    %v2533 = vmul.f32 %v2495, 0.5
    %v2534 = vmul.f32 %v2500, 0.5
    %v2535 = vmul.f32 %v2505, 0.5
    %v2536 = vmul.f32 %v2510, 0.5
    %v2537 = vmul.f32 %v2515, 0.5
    %v2538 = vmul.f32 %v2520, 0.5
    %v2539 = vmul.f32 %v2525, 0.5
    %v2540 = vmul.f32 %v2530, 0.5
    %v2541 = vmul.f32 %v2495, 0.044715
    %v2542 = vmul.f32 %v2500, 0.044715
    %v2543 = vmul.f32 %v2505, 0.044715
    %v2544 = vmul.f32 %v2510, 0.044715
    %v2545 = vmul.f32 %v2515, 0.044715
    %v2546 = vmul.f32 %v2520, 0.044715
    %v2547 = vmul.f32 %v2525, 0.044715
    %v2548 = vmul.f32 %v2530, 0.044715
    %v2549 = vmul.f32 %v2541, %v2495
    %v2550 = vmul.f32 %v2542, %v2500
    %v2551 = vmul.f32 %v2543, %v2505
    %v2552 = vmul.f32 %v2544, %v2510
    %v2553 = vmul.f32 %v2545, %v2515
    %v2554 = vmul.f32 %v2546, %v2520
    %v2555 = vmul.f32 %v2547, %v2525
    %v2556 = vmul.f32 %v2548, %v2530
    %v2557 = vmul.f32 %v2549, %v2495
    %v2558 = vmul.f32 %v2550, %v2500
    %v2559 = vmul.f32 %v2551, %v2505
    %v2560 = vmul.f32 %v2552, %v2510
    %v2561 = vmul.f32 %v2553, %v2515
    %v2562 = vmul.f32 %v2554, %v2520
    %v2563 = vmul.f32 %v2555, %v2525
    %v2564 = vmul.f32 %v2556, %v2530
    %v2565 = vadd.f32 %v2495, %v2557
    %v2566 = vadd.f32 %v2500, %v2558
    %v2567 = vadd.f32 %v2505, %v2559
    %v2568 = vadd.f32 %v2510, %v2560
    %v2569 = vadd.f32 %v2515, %v2561
    %v2570 = vadd.f32 %v2520, %v2562
    %v2571 = vadd.f32 %v2525, %v2563
    %v2572 = vadd.f32 %v2530, %v2564
    %v2573 = vmul.f32 %v2565, 0.7978846
    %v2574 = vmul.f32 %v2566, 0.7978846
    %v2575 = vmul.f32 %v2567, 0.7978846
    %v2576 = vmul.f32 %v2568, 0.7978846
    %v2577 = vmul.f32 %v2569, 0.7978846
    %v2578 = vmul.f32 %v2570, 0.7978846
    %v2579 = vmul.f32 %v2571, 0.7978846
    %v2580 = vmul.f32 %v2572, 0.7978846
    %v2581 = vtanh.pop %v2573
    %v2582 = vtanh.pop %v2574
    %v2583 = vtanh.pop %v2575
    %v2584 = vtanh.pop %v2576
    %v2585 = vtanh.pop %v2577
    %v2586 = vtanh.pop %v2578
    %v2587 = vtanh.pop %v2579
    %v2588 = vtanh.pop %v2580
    %v2589 = vadd.f32 %v2581, 1.0
    %v2590 = vadd.f32 %v2582, 1.0
    %v2591 = vadd.f32 %v2583, 1.0
    %v2592 = vadd.f32 %v2584, 1.0
    %v2593 = vadd.f32 %v2585, 1.0
    %v2594 = vadd.f32 %v2586, 1.0
    %v2595 = vadd.f32 %v2587, 1.0
    %v2596 = vadd.f32 %v2588, 1.0
    %v2597 = vmul.f32 %v2533, %v2589
    %v2598 = vmul.f32 %v2534, %v2590
    %v2599 = vmul.f32 %v2535, %v2591
    %v2600 = vmul.f32 %v2536, %v2592
    %v2601 = vmul.f32 %v2537, %v2593
    %v2602 = vmul.f32 %v2538, %v2594
    %v2603 = vmul.f32 %v2539, %v2595
    %v2604 = vmul.f32 %v2540, %v2596
    %v2605 = vlaneseq
    %v2606 = vshrl.u32 %v2605, 7
    %v2607 = vsub.s32 0, %v2606
    %v2608 = vrot.slane %v95, %v2607
    %v2610 = vsel %vm521, %v2597, 0
    %v2613 = vsel %vm521, %v2598, 0
    %v2616 = vsel %vm521, %v2599, 0
    %v2619 = vsel %vm521, %v2600, 0
    %v2622 = vsel %vm521, %v2601, 0
    %v2625 = vsel %vm521, %v2602, 0
    %v2628 = vsel %vm521, %v2603, 0
    %v2631 = vsel %vm521, %v2604, 0
    %2633 = vmatprep.subr.mxu0 0.0
    %2634 = vmatpush1.msra.mxu0 %v80
    %2635 = vmatprep.subr.mxu0 0.0
    %2636 = vmatpush1.msra.mxu0 %v81
    %2637 = vmatprep.subr.mxu0 0.0
    %2638 = vmatpush1.msra.mxu0 %v82
    %2639 = vmatprep.subr.mxu0 0.0
    %2640 = vmatpush1.msra.mxu0 %v83
    %2641 = vmatprep.subr.mxu0 0.0
    %2642 = vmatpush1.msra.mxu0 %v84
    %2643 = vmatprep.subr.mxu0 0.0
    %2644 = vmatpush1.msra.mxu0 %v85
    %2645 = vmatprep.subr.mxu0 0.0
    %2646 = vmatpush1.msra.mxu0 %v86
    %2647 = vmatprep.subr.mxu0 0.0
    %2648 = vmatpush1.msra.mxu0 %v87
    %2649 = vmatprep.subr.mxu0 0.0
    %2650 = vmatpush1.msra.mxu0 0.0
    %2651 = vmatprep.subr.mxu0 0.0
    %2652 = vmatpush1.msra.mxu0 0.0
    %2653 = vmatprep.subr.mxu0 0.0
    %2654 = vmatpush1.msra.mxu0 0.0
    %2655 = vmatprep.subr.mxu0 0.0
    %2656 = vmatpush1.msra.mxu0 0.0
    %2657 = vmatprep.subr.mxu0 0.0
    %2658 = vmatpush1.msra.mxu0 0.0
    %2659 = vmatprep.subr.mxu0 0.0
    %2660 = vmatpush1.msra.mxu0 0.0
    %2661 = vmatprep.subr.mxu0 0.0
    %2662 = vmatpush1.msra.mxu0 0.0
    %2663 = vmatprep.subr.mxu0 0.0
    %2664 = vmatpush1.msra.mxu0 0.0
    %2665 = vmatprep.subr.mxu0 0.0
    %2666 = vmatpush1.msra.mxu0 0.0
    %2667 = vmatprep.subr.mxu0 0.0
    %2668 = vmatpush1.msra.mxu0 0.0
    %2669 = vmatprep.subr.mxu0 0.0
    %2670 = vmatpush1.msra.mxu0 0.0
    %2671 = vmatprep.subr.mxu0 0.0
    %2672 = vmatpush1.msra.mxu0 0.0
    %2673 = vmatprep.subr.mxu0 0.0
    %2674 = vmatpush1.msra.mxu0 0.0
    %2675 = vmatprep.subr.mxu0 0.0
    %2676 = vmatpush1.msra.mxu0 0.0
    %2677 = vmatprep.subr.mxu0 0.0
    %2678 = vmatpush1.msra.mxu0 0.0
    %2679 = vmatprep.subr.mxu0 0.0
    %2680 = vmatpush1.msra.mxu0 0.0
    %2681 = vmatprep.subr.mxu0 0.0
    %2682 = vmatpush1.msra.mxu0 0.0
    %2683 = vmatprep.subr.mxu0 0.0
    %2684 = vmatpush1.msra.mxu0 0.0
    %2685 = vmatprep.subr.mxu0 0.0
    %2686 = vmatpush1.msra.mxu0 0.0
    %2687 = vmatprep.subr.mxu0 0.0
    %2688 = vmatpush1.msra.mxu0 0.0
    %2689 = vmatprep.subr.mxu0 0.0
    %2690 = vmatpush1.msra.mxu0 0.0
    %2691 = vmatprep.subr.mxu0 0.0
    %2692 = vmatpush1.msra.mxu0 0.0
    %2693 = vmatprep.subr.mxu0 0.0
    %2694 = vmatpush1.msra.mxu0 0.0
    %2695 = vmatprep.subr.mxu0 0.0
    %2696 = vmatpush1.msra.mxu0 0.0
    %2697 = vmatprep.mubr.f32.mxu0 0.0
    %2698 = vmatmul.mubr.f32.gmra.mrb[0].mxu0 %v2610
    %v2699 = vpop.f32.mrb[0].mxu0
    %v2700 = vadd.f32 %v2608, %v2699
    %v2701 = vpop.f32.mrb[0].mxu0
    %2702 = vmatprep.mubr.f32.mxu0 0.0
    %2703 = vmatmul.mubr.f32.gmra.mrb[0].mxu0 %v2613
    %v2704 = vpop.f32.mrb[0].mxu0
    %v2705 = vadd.f32 %v2608, %v2704
    %v2706 = vpop.f32.mrb[0].mxu0
    %2707 = vmatprep.mubr.f32.mxu0 0.0
    %2708 = vmatmul.mubr.f32.gmra.mrb[0].mxu0 %v2616
    %v2709 = vpop.f32.mrb[0].mxu0
    %v2710 = vadd.f32 %v2608, %v2709
    %v2711 = vpop.f32.mrb[0].mxu0
    %2712 = vmatprep.mubr.f32.mxu0 0.0
    %2713 = vmatmul.mubr.f32.gmra.mrb[0].mxu0 %v2619
    %v2714 = vpop.f32.mrb[0].mxu0
    %v2715 = vadd.f32 %v2608, %v2714
    %v2716 = vpop.f32.mrb[0].mxu0
    %2717 = vmatprep.mubr.f32.mxu0 0.0
    %2718 = vmatmul.mubr.f32.gmra.mrb[0].mxu0 %v2622
    %v2719 = vpop.f32.mrb[0].mxu0
    %v2720 = vadd.f32 %v2608, %v2719
    %v2721 = vpop.f32.mrb[0].mxu0
    %2722 = vmatprep.mubr.f32.mxu0 0.0
    %2723 = vmatmul.mubr.f32.gmra.mrb[0].mxu0 %v2625
    %v2724 = vpop.f32.mrb[0].mxu0
    %v2725 = vadd.f32 %v2608, %v2724
    %v2726 = vpop.f32.mrb[0].mxu0
    %2727 = vmatprep.mubr.f32.mxu0 0.0
    %2728 = vmatmul.mubr.f32.gmra.mrb[0].mxu0 %v2628
    %v2729 = vpop.f32.mrb[0].mxu0
    %v2730 = vadd.f32 %v2608, %v2729
    %v2731 = vpop.f32.mrb[0].mxu0
    %2732 = vmatprep.mubr.f32.mxu0 0.0
    %2733 = vmatmul.mubr.f32.gmra.mrb[0].mxu0 %v2631
    %v2734 = vpop.f32.mrb[0].mxu0
    %v2735 = vadd.f32 %v2608, %v2734
    %v2736 = vpop.f32.mrb[0].mxu0
    %2737 = vdwg.mxu0
    %v2738 = vadd.f32 %v2264, %v2700
    %v2739 = vadd.f32 %v2265, %v2705
    %v2740 = vadd.f32 %v2266, %v2710
    %v2741 = vadd.f32 %v2267, %v2715
    %v2742 = vadd.f32 %v2268, %v2720
    %v2743 = vadd.f32 %v2269, %v2725
    %v2744 = vadd.f32 %v2270, %v2730
    %v2745 = vadd.f32 %v2271, %v2735
    %2746 = vst.msk [vmem:[#allocation8] sm:$0xff] %vm96, %v2738
    %2747 = vst.msk [vmem:[#allocation8 + $0x8] sm:$0xff] %vm96, %v2739
    %2748 = vst.msk [vmem:[#allocation8 + $0x10] sm:$0xff] %vm96, %v2740
    %2749 = vst.msk [vmem:[#allocation8 + $0x18] sm:$0xff] %vm96, %v2741
    %2750 = vst.msk [vmem:[#allocation8 + $0x20] sm:$0xff] %vm96, %v2742
    %2751 = vst.msk [vmem:[#allocation8 + $0x28] sm:$0xff] %vm96, %v2743
    %2752 = vst.msk [vmem:[#allocation8 + $0x30] sm:$0xff] %vm96, %v2744
    %2753 = vst.msk [vmem:[#allocation8 + $0x38] sm:$0xff] %vm96, %v2745
    // Predicated region
    $region26: #{sparse_transformer_block.1} parent=1 // pred_check
      _
    $region27: #{sparse_transformer_block.1} parent=1 // pred_check_branch
      %2755 = sbr.rel (0) target = $region29
    $region28: #{sparse_transformer_block.1} parent=1 // pred_region
      %s2757 = ssub.s32 1024, 1024
      %2758 = vsyncadd [#allocation4], %s2757
      %s2759 = sshll.u32 [#allocation8], 4
      %s2760 = int_to_ptr.vmem [resolvable:$true] %s2759
      %2765 = dma.vmem_to_hbm [thread:$0]  %s2760, 1024, %s3, [#allocation4], 128, 128, 8
    $region29: #{sparse_transformer_block.1} parent=1 // pred_fallthru
      _
    // Predicated region
    $region30: #{sparse_transformer_block.1} parent=1 // pred_check
      _
    $region31: #{sparse_transformer_block.1} parent=1 // pred_check_branch
      %2767 = sbr.rel (0) target = $region33
    $region32: #{sparse_transformer_block.1} parent=1 // pred_region
      %2768 = dma.done [#allocation4], 1024
    $region33: #{sparse_transformer_block.1} parent=1 // pred_fallthru
      _
    %2769 = vsyncpa [#allocation3], 1
    %2770 = vsyncpa [#allocation6], 1
    %2771 = vsyncpa [#allocation4], 1

</llo_original>
